<compile_context>
chip_gen: v6e
topology: v6e:2x2x1
jax: 0.10.0
libtpu: 0.0.40
codegen_flags: <defaults>
</compile_context>

<pallas_src>
import functools

import jax
import jax.numpy as jnp
from jax import lax
from jax.experimental import pallas as pl
from jax.experimental.pallas import tpu as pltpu
import numpy as np


def lstm_heads_kernel(ids_ref,    # (S*B,)     int32, SMEM: token ids, time-major flat
                      gtab_ref,   # (V, 1, 4H) f32: emb @ W_ih^T + (b_ih+b_hh), cols [i|f|g|o]
                      whh_ref,    # (H, 4H)    f32: W_hh^T, gate cols [i|f|g|o]
                      whead_ref,  # (H, O1+O2) f32: fused hidden2out -> (fc1|fc2) weight
                      bhead_ref,  # (1, O1+O2) f32: fused head bias
                      out_ref):   # (B, O1+O2)
    B = out_ref.shape[0]
    SB = ids_ref.shape[0]
    S = SB // B
    H = whh_ref.shape[0]
    H4 = whh_ref.shape[1]

    # Recurrent weight resident in vregs for the whole unrolled recurrence.
    whh = whh_ref[...]                                               # (H, 4H)

    # Fused embedding gather + input projection: gather the pre-projected, lane-dense
    # 4H-wide gate rows by SMEM token id.  These do not depend on h, so they sit off
    # the serial h->h dependence chain and are free filler for the scheduler.
    xgates = []
    for t in range(S):
        rows = [gtab_ref[ids_ref[t * B + b]] for b in range(B)]      # each (1, 4H)
        xgates.append(jnp.concatenate(rows, axis=0))                 # (B, 4H)

    # One sigmoid + one tanh over the full 4H-wide gate slab per step, lane-selected:
    # tanh only on the cell-candidate block (PyTorch gate order [i, f, g, o]).
    lane = lax.broadcasted_iota(jnp.int32, (B, H4), 1)
    g_mask = (lane >= 2 * H) & (lane < 3 * H)

    # h0 = c0 = 0 (PyTorch default when no initial state is supplied).
    h = jnp.zeros((B, H), jnp.float32)
    c = jnp.zeros((B, H), jnp.float32)

    # Fully-unrolled recurrence: h/c carried in vregs, one lane-dense (H,4H) MXU
    # matmul per step, 3 EUP ops per step, static lane extracts on the idle XLU.
    for t in range(S):
        g_all = xgates[t] + jnp.dot(h, whh, preferred_element_type=jnp.float32)
        act = jnp.where(g_mask, jnp.tanh(g_all), jax.nn.sigmoid(g_all))
        i_g = act[:, 0 * H:1 * H]
        f_g = act[:, 1 * H:2 * H]
        g_g = act[:, 2 * H:3 * H]
        o_g = act[:, 3 * H:4 * H]
        c = f_g * c + i_g * g_g
        h = o_g * jnp.tanh(c)

    # Fused epilogue: hidden2out -> (fc1 | fc2) collapsed into one affine map.
    out_ref[...] = (jnp.dot(h, whead_ref[...], preferred_element_type=jnp.float32)
                    + bhead_ref[...])


def make_params(key, vocab_size, emb_dim, hidden_dim, ls_dim, out1_dim, out2_dim):
    ks = jax.random.split(key, 10)
    s = 0.1
    p = {
        "emb":    jax.random.normal(ks[0], (vocab_size, emb_dim), jnp.float32) * s,
        "w_ih":   jax.random.normal(ks[1], (4 * hidden_dim, emb_dim), jnp.float32) * s,
        "w_hh":   jax.random.normal(ks[2], (4 * hidden_dim, hidden_dim), jnp.float32) * s,
        "b_ih":   jax.random.normal(ks[3], (4 * hidden_dim,), jnp.float32) * s,
        "b_hh":   jax.random.normal(ks[4], (4 * hidden_dim,), jnp.float32) * s,
        "w_h2o":  jax.random.normal(ks[5], (ls_dim, hidden_dim), jnp.float32) * s,
        "b_h2o":  jax.random.normal(ks[6], (ls_dim,), jnp.float32) * s,
        "w_fc1":  jax.random.normal(ks[7], (out1_dim, ls_dim), jnp.float32) * s,
        "b_fc1":  jax.random.normal(ks[8], (out1_dim,), jnp.float32) * s,
        "w_fc2":  jax.random.normal(ks[9], (out2_dim, ls_dim), jnp.float32) * s,
        "b_fc2":  jnp.zeros((out2_dim,), jnp.float32),
    }
    return p


def prepare_params(params):
    """One-time weight re-layout. Call once and cache; do NOT rebuild per forward call."""
    # Embedding + input projection fused into a per-token gate table (exact algebra):
    #   emb[ids] @ W_ih^T + (b_ih + b_hh) == (emb @ W_ih^T + (b_ih + b_hh))[ids]
    gate_table = (params["emb"] @ params["w_ih"].T
                  + (params["b_ih"] + params["b_hh"])[None, :])             # (V, 4H)
    gate_table = gate_table[:, None, :]                                     # (V, 1, 4H)

    whh_cat = params["w_hh"].T                                              # (H, 4H)

    # Fuse hidden2out -> (fc1 | fc2) into one affine map (exact: affine-of-affine).
    L = params["w_h2o"].shape[0]
    wcat = jnp.concatenate([params["w_fc1"].T, params["w_fc2"].T], axis=1)  # (L, O1+O2)
    w_head = params["w_h2o"].T @ wcat                                       # (H, O1+O2)
    b_head = (params["b_h2o"].reshape(1, L) @ wcat
              + jnp.concatenate([params["b_fc1"], params["b_fc2"]])[None, :])

    prepped = {
        "gate_table": gate_table.astype(jnp.float32),
        "whh_cat":    whh_cat.astype(jnp.float32),
        "w_head":     w_head.astype(jnp.float32),
        "b_head":     b_head.astype(jnp.float32),
    }
    o1 = params["w_fc1"].shape[0]
    return prepped, o1


@functools.partial(jax.jit, static_argnames=("o1",))
def lstm_1_in_2_out(sent, prepped, o1):
    """sent: (seq_len, batch) int32 token ids. Returns (out1 (B,O1), out2 (B,O2))."""
    S, B = sent.shape
    ids = sent.reshape(S * B).astype(jnp.int32)      # time-major flat: index t*B + b
    Ocat = prepped["w_head"].shape[1]

    smem = pl.BlockSpec(memory_space=pltpu.MemorySpace.SMEM)
    vmem = pl.BlockSpec(memory_space=pltpu.MemorySpace.VMEM)

    # TODO(synk): for non-toy sizes, add a batch-parallel grid axis (2 TCs on v7x),
    # time-chunk the gathered gates against 64 MiB VMEM, switch the Python unroll to
    # lax.fori_loop(unroll=k), and cast MXU operands to bf16 with f32 accumulation.
    out = pl.pallas_call(
        lstm_heads_kernel,
        out_shape=jax.ShapeDtypeStruct((B, Ocat), jnp.float32),
        in_specs=[smem, vmem, vmem, vmem, vmem],
        out_specs=vmem,
    )(ids, prepped["gate_table"], prepped["whh_cat"],
      prepped["w_head"], prepped["b_head"])

    return out[:, :o1], out[:, o1:]


def reference_forward(sent, params):
    """Pure-JAX reference reproducing nn.Embedding -> nn.LSTM -> Linears (unfused)."""
    embeds = params["emb"][sent]                      # (S, B, E)
    H = params["w_hh"].shape[1]
    B = embeds.shape[1]

    def step(carry, x_t):
        h, c = carry
        gates = (x_t @ params["w_ih"].T + params["b_ih"]
                 + h @ params["w_hh"].T + params["b_hh"])
        i_g = jax.nn.sigmoid(gates[:, 0 * H:1 * H])
        f_g = jax.nn.sigmoid(gates[:, 1 * H:2 * H])
        g_g = jnp.tanh(gates[:, 2 * H:3 * H])
        o_g = jax.nn.sigmoid(gates[:, 3 * H:4 * H])
        c_new = f_g * c + i_g * g_g
        h_new = o_g * jnp.tanh(c_new)
        return (h_new, c_new), h_new

    h0 = jnp.zeros((B, H), jnp.float32)
    (h_final, _), _ = lax.scan(step, (h0, h0), embeds)
    x = h_final @ params["w_h2o"].T + params["b_h2o"]
    out1 = x @ params["w_fc1"].T + params["b_fc1"]
    out2 = x @ params["w_fc2"].T + params["b_fc2"]
    return out1, out2


if __name__ == "__main__":
    vocab_size, emb_dim, hidden_dim, ls_dim = 32, 16, 32, 16
    output_1_dim, output_2_dim = 8, 4
    seq_len, batch = 8, 4

    key = jax.random.PRNGKey(0)
    pkey, skey = jax.random.split(key)
    params = make_params(pkey, vocab_size, emb_dim, hidden_dim, ls_dim,
                         output_1_dim, output_2_dim)
    sent = jax.random.randint(skey, (seq_len, batch), 0, vocab_size, dtype=jnp.int32)

    # One-time weight re-layout (cached across calls).
    prepped, o1 = prepare_params(params)
    prepped = jax.tree_util.tree_map(jax.block_until_ready, prepped)

    out1, out2 = lstm_1_in_2_out(sent, prepped, o1)
    jax.block_until_ready((out1, out2))

    ref1, ref2 = reference_forward(sent, params)
    np.testing.assert_allclose(np.asarray(out1), np.asarray(ref1), rtol=1e-4, atol=1e-5)
    np.testing.assert_allclose(np.asarray(out2), np.asarray(ref2), rtol=1e-4, atol=1e-5)

    print("KERNEL_OK")
</pallas_src>

<mosaic_0001>
module attributes {stable_mosaic.version = 11 : i64} {
  func.func @lstm_heads_kernel(%arg0: memref<32xi32, #tpu.memory_space<smem>>, %arg1: memref<32x1x128xf32, #tpu.memory_space<vmem>>, %arg2: memref<32x128xf32, #tpu.memory_space<vmem>>, %arg3: memref<32x12xf32, #tpu.memory_space<vmem>>, %arg4: memref<1x12xf32, #tpu.memory_space<vmem>>, %arg5: memref<4x12xf32, #tpu.memory_space<vmem>>) attributes {dimension_semantics = [], scalar_prefetch = 0 : i64, scratch_operands = 0 : i64, tpu.core_type = #tpu.core_type<tc>} {
    %c0 = arith.constant 0 : index
    %c0_0 = arith.constant 0 : index
    %0 = vector.load %arg2[%c0, %c0_0] : memref<32x128xf32, #tpu.memory_space<vmem>>, vector<32x128xf32>
    %c0_1 = arith.constant 0 : index
    %1 = memref.load %arg0[%c0_1] : memref<32xi32, #tpu.memory_space<smem>>
    %2 = arith.index_cast %1 : i32 to index
    %c0_2 = arith.constant 0 : index
    %c0_3 = arith.constant 0 : index
    %3 = vector.load %arg1[%2, %c0_2, %c0_3] : memref<32x1x128xf32, #tpu.memory_space<vmem>>, vector<1x1x128xf32>
    %4 = vector.shape_cast %3 : vector<1x1x128xf32> to vector<1x128xf32>
    %c1 = arith.constant 1 : index
    %5 = memref.load %arg0[%c1] : memref<32xi32, #tpu.memory_space<smem>>
    %6 = arith.index_cast %5 : i32 to index
    %c0_4 = arith.constant 0 : index
    %c0_5 = arith.constant 0 : index
    %7 = vector.load %arg1[%6, %c0_4, %c0_5] : memref<32x1x128xf32, #tpu.memory_space<vmem>>, vector<1x1x128xf32>
    %8 = vector.shape_cast %7 : vector<1x1x128xf32> to vector<1x128xf32>
    %c2 = arith.constant 2 : index
    %9 = memref.load %arg0[%c2] : memref<32xi32, #tpu.memory_space<smem>>
    %10 = arith.index_cast %9 : i32 to index
    %c0_6 = arith.constant 0 : index
    %c0_7 = arith.constant 0 : index
    %11 = vector.load %arg1[%10, %c0_6, %c0_7] : memref<32x1x128xf32, #tpu.memory_space<vmem>>, vector<1x1x128xf32>
    %12 = vector.shape_cast %11 : vector<1x1x128xf32> to vector<1x128xf32>
    %c3 = arith.constant 3 : index
    %13 = memref.load %arg0[%c3] : memref<32xi32, #tpu.memory_space<smem>>
    %14 = arith.index_cast %13 : i32 to index
    %c0_8 = arith.constant 0 : index
    %c0_9 = arith.constant 0 : index
    %15 = vector.load %arg1[%14, %c0_8, %c0_9] : memref<32x1x128xf32, #tpu.memory_space<vmem>>, vector<1x1x128xf32>
    %16 = vector.shape_cast %15 : vector<1x1x128xf32> to vector<1x128xf32>
    %17 = tpu.concatenate %4, %8, %12, %16 in 0 : vector<1x128xf32>, vector<1x128xf32>, vector<1x128xf32>, vector<1x128xf32> -> vector<4x128xf32>
    %c4 = arith.constant 4 : index
    %18 = memref.load %arg0[%c4] : memref<32xi32, #tpu.memory_space<smem>>
    %19 = arith.index_cast %18 : i32 to index
    %c0_10 = arith.constant 0 : index
    %c0_11 = arith.constant 0 : index
    %20 = vector.load %arg1[%19, %c0_10, %c0_11] : memref<32x1x128xf32, #tpu.memory_space<vmem>>, vector<1x1x128xf32>
    %21 = vector.shape_cast %20 : vector<1x1x128xf32> to vector<1x128xf32>
    %c5 = arith.constant 5 : index
    %22 = memref.load %arg0[%c5] : memref<32xi32, #tpu.memory_space<smem>>
    %23 = arith.index_cast %22 : i32 to index
    %c0_12 = arith.constant 0 : index
    %c0_13 = arith.constant 0 : index
    %24 = vector.load %arg1[%23, %c0_12, %c0_13] : memref<32x1x128xf32, #tpu.memory_space<vmem>>, vector<1x1x128xf32>
    %25 = vector.shape_cast %24 : vector<1x1x128xf32> to vector<1x128xf32>
    %c6 = arith.constant 6 : index
    %26 = memref.load %arg0[%c6] : memref<32xi32, #tpu.memory_space<smem>>
    %27 = arith.index_cast %26 : i32 to index
    %c0_14 = arith.constant 0 : index
    %c0_15 = arith.constant 0 : index
    %28 = vector.load %arg1[%27, %c0_14, %c0_15] : memref<32x1x128xf32, #tpu.memory_space<vmem>>, vector<1x1x128xf32>
    %29 = vector.shape_cast %28 : vector<1x1x128xf32> to vector<1x128xf32>
    %c7 = arith.constant 7 : index
    %30 = memref.load %arg0[%c7] : memref<32xi32, #tpu.memory_space<smem>>
    %31 = arith.index_cast %30 : i32 to index
    %c0_16 = arith.constant 0 : index
    %c0_17 = arith.constant 0 : index
    %32 = vector.load %arg1[%31, %c0_16, %c0_17] : memref<32x1x128xf32, #tpu.memory_space<vmem>>, vector<1x1x128xf32>
    %33 = vector.shape_cast %32 : vector<1x1x128xf32> to vector<1x128xf32>
    %34 = tpu.concatenate %21, %25, %29, %33 in 0 : vector<1x128xf32>, vector<1x128xf32>, vector<1x128xf32>, vector<1x128xf32> -> vector<4x128xf32>
    %c8 = arith.constant 8 : index
    %35 = memref.load %arg0[%c8] : memref<32xi32, #tpu.memory_space<smem>>
    %36 = arith.index_cast %35 : i32 to index
    %c0_18 = arith.constant 0 : index
    %c0_19 = arith.constant 0 : index
    %37 = vector.load %arg1[%36, %c0_18, %c0_19] : memref<32x1x128xf32, #tpu.memory_space<vmem>>, vector<1x1x128xf32>
    %38 = vector.shape_cast %37 : vector<1x1x128xf32> to vector<1x128xf32>
    %c9 = arith.constant 9 : index
    %39 = memref.load %arg0[%c9] : memref<32xi32, #tpu.memory_space<smem>>
    %40 = arith.index_cast %39 : i32 to index
    %c0_20 = arith.constant 0 : index
    %c0_21 = arith.constant 0 : index
    %41 = vector.load %arg1[%40, %c0_20, %c0_21] : memref<32x1x128xf32, #tpu.memory_space<vmem>>, vector<1x1x128xf32>
    %42 = vector.shape_cast %41 : vector<1x1x128xf32> to vector<1x128xf32>
    %c10 = arith.constant 10 : index
    %43 = memref.load %arg0[%c10] : memref<32xi32, #tpu.memory_space<smem>>
    %44 = arith.index_cast %43 : i32 to index
    %c0_22 = arith.constant 0 : index
    %c0_23 = arith.constant 0 : index
    %45 = vector.load %arg1[%44, %c0_22, %c0_23] : memref<32x1x128xf32, #tpu.memory_space<vmem>>, vector<1x1x128xf32>
    %46 = vector.shape_cast %45 : vector<1x1x128xf32> to vector<1x128xf32>
    %c11 = arith.constant 11 : index
    %47 = memref.load %arg0[%c11] : memref<32xi32, #tpu.memory_space<smem>>
    %48 = arith.index_cast %47 : i32 to index
    %c0_24 = arith.constant 0 : index
    %c0_25 = arith.constant 0 : index
    %49 = vector.load %arg1[%48, %c0_24, %c0_25] : memref<32x1x128xf32, #tpu.memory_space<vmem>>, vector<1x1x128xf32>
    %50 = vector.shape_cast %49 : vector<1x1x128xf32> to vector<1x128xf32>
    %51 = tpu.concatenate %38, %42, %46, %50 in 0 : vector<1x128xf32>, vector<1x128xf32>, vector<1x128xf32>, vector<1x128xf32> -> vector<4x128xf32>
    %c12 = arith.constant 12 : index
    %52 = memref.load %arg0[%c12] : memref<32xi32, #tpu.memory_space<smem>>
    %53 = arith.index_cast %52 : i32 to index
    %c0_26 = arith.constant 0 : index
    %c0_27 = arith.constant 0 : index
    %54 = vector.load %arg1[%53, %c0_26, %c0_27] : memref<32x1x128xf32, #tpu.memory_space<vmem>>, vector<1x1x128xf32>
    %55 = vector.shape_cast %54 : vector<1x1x128xf32> to vector<1x128xf32>
    %c13 = arith.constant 13 : index
    %56 = memref.load %arg0[%c13] : memref<32xi32, #tpu.memory_space<smem>>
    %57 = arith.index_cast %56 : i32 to index
    %c0_28 = arith.constant 0 : index
    %c0_29 = arith.constant 0 : index
    %58 = vector.load %arg1[%57, %c0_28, %c0_29] : memref<32x1x128xf32, #tpu.memory_space<vmem>>, vector<1x1x128xf32>
    %59 = vector.shape_cast %58 : vector<1x1x128xf32> to vector<1x128xf32>
    %c14 = arith.constant 14 : index
    %60 = memref.load %arg0[%c14] : memref<32xi32, #tpu.memory_space<smem>>
    %61 = arith.index_cast %60 : i32 to index
    %c0_30 = arith.constant 0 : index
    %c0_31 = arith.constant 0 : index
    %62 = vector.load %arg1[%61, %c0_30, %c0_31] : memref<32x1x128xf32, #tpu.memory_space<vmem>>, vector<1x1x128xf32>
    %63 = vector.shape_cast %62 : vector<1x1x128xf32> to vector<1x128xf32>
    %c15 = arith.constant 15 : index
    %64 = memref.load %arg0[%c15] : memref<32xi32, #tpu.memory_space<smem>>
    %65 = arith.index_cast %64 : i32 to index
    %c0_32 = arith.constant 0 : index
    %c0_33 = arith.constant 0 : index
    %66 = vector.load %arg1[%65, %c0_32, %c0_33] : memref<32x1x128xf32, #tpu.memory_space<vmem>>, vector<1x1x128xf32>
    %67 = vector.shape_cast %66 : vector<1x1x128xf32> to vector<1x128xf32>
    %68 = tpu.concatenate %55, %59, %63, %67 in 0 : vector<1x128xf32>, vector<1x128xf32>, vector<1x128xf32>, vector<1x128xf32> -> vector<4x128xf32>
    %c16 = arith.constant 16 : index
    %69 = memref.load %arg0[%c16] : memref<32xi32, #tpu.memory_space<smem>>
    %70 = arith.index_cast %69 : i32 to index
    %c0_34 = arith.constant 0 : index
    %c0_35 = arith.constant 0 : index
    %71 = vector.load %arg1[%70, %c0_34, %c0_35] : memref<32x1x128xf32, #tpu.memory_space<vmem>>, vector<1x1x128xf32>
    %72 = vector.shape_cast %71 : vector<1x1x128xf32> to vector<1x128xf32>
    %c17 = arith.constant 17 : index
    %73 = memref.load %arg0[%c17] : memref<32xi32, #tpu.memory_space<smem>>
    %74 = arith.index_cast %73 : i32 to index
    %c0_36 = arith.constant 0 : index
    %c0_37 = arith.constant 0 : index
    %75 = vector.load %arg1[%74, %c0_36, %c0_37] : memref<32x1x128xf32, #tpu.memory_space<vmem>>, vector<1x1x128xf32>
    %76 = vector.shape_cast %75 : vector<1x1x128xf32> to vector<1x128xf32>
    %c18 = arith.constant 18 : index
    %77 = memref.load %arg0[%c18] : memref<32xi32, #tpu.memory_space<smem>>
    %78 = arith.index_cast %77 : i32 to index
    %c0_38 = arith.constant 0 : index
    %c0_39 = arith.constant 0 : index
    %79 = vector.load %arg1[%78, %c0_38, %c0_39] : memref<32x1x128xf32, #tpu.memory_space<vmem>>, vector<1x1x128xf32>
    %80 = vector.shape_cast %79 : vector<1x1x128xf32> to vector<1x128xf32>
    %c19 = arith.constant 19 : index
    %81 = memref.load %arg0[%c19] : memref<32xi32, #tpu.memory_space<smem>>
    %82 = arith.index_cast %81 : i32 to index
    %c0_40 = arith.constant 0 : index
    %c0_41 = arith.constant 0 : index
    %83 = vector.load %arg1[%82, %c0_40, %c0_41] : memref<32x1x128xf32, #tpu.memory_space<vmem>>, vector<1x1x128xf32>
    %84 = vector.shape_cast %83 : vector<1x1x128xf32> to vector<1x128xf32>
    %85 = tpu.concatenate %72, %76, %80, %84 in 0 : vector<1x128xf32>, vector<1x128xf32>, vector<1x128xf32>, vector<1x128xf32> -> vector<4x128xf32>
    %c20 = arith.constant 20 : index
    %86 = memref.load %arg0[%c20] : memref<32xi32, #tpu.memory_space<smem>>
    %87 = arith.index_cast %86 : i32 to index
    %c0_42 = arith.constant 0 : index
    %c0_43 = arith.constant 0 : index
    %88 = vector.load %arg1[%87, %c0_42, %c0_43] : memref<32x1x128xf32, #tpu.memory_space<vmem>>, vector<1x1x128xf32>
    %89 = vector.shape_cast %88 : vector<1x1x128xf32> to vector<1x128xf32>
    %c21 = arith.constant 21 : index
    %90 = memref.load %arg0[%c21] : memref<32xi32, #tpu.memory_space<smem>>
    %91 = arith.index_cast %90 : i32 to index
    %c0_44 = arith.constant 0 : index
    %c0_45 = arith.constant 0 : index
    %92 = vector.load %arg1[%91, %c0_44, %c0_45] : memref<32x1x128xf32, #tpu.memory_space<vmem>>, vector<1x1x128xf32>
    %93 = vector.shape_cast %92 : vector<1x1x128xf32> to vector<1x128xf32>
    %c22 = arith.constant 22 : index
    %94 = memref.load %arg0[%c22] : memref<32xi32, #tpu.memory_space<smem>>
    %95 = arith.index_cast %94 : i32 to index
    %c0_46 = arith.constant 0 : index
    %c0_47 = arith.constant 0 : index
    %96 = vector.load %arg1[%95, %c0_46, %c0_47] : memref<32x1x128xf32, #tpu.memory_space<vmem>>, vector<1x1x128xf32>
    %97 = vector.shape_cast %96 : vector<1x1x128xf32> to vector<1x128xf32>
    %c23 = arith.constant 23 : index
    %98 = memref.load %arg0[%c23] : memref<32xi32, #tpu.memory_space<smem>>
    %99 = arith.index_cast %98 : i32 to index
    %c0_48 = arith.constant 0 : index
    %c0_49 = arith.constant 0 : index
    %100 = vector.load %arg1[%99, %c0_48, %c0_49] : memref<32x1x128xf32, #tpu.memory_space<vmem>>, vector<1x1x128xf32>
    %101 = vector.shape_cast %100 : vector<1x1x128xf32> to vector<1x128xf32>
    %102 = tpu.concatenate %89, %93, %97, %101 in 0 : vector<1x128xf32>, vector<1x128xf32>, vector<1x128xf32>, vector<1x128xf32> -> vector<4x128xf32>
    %c24 = arith.constant 24 : index
    %103 = memref.load %arg0[%c24] : memref<32xi32, #tpu.memory_space<smem>>
    %104 = arith.index_cast %103 : i32 to index
    %c0_50 = arith.constant 0 : index
    %c0_51 = arith.constant 0 : index
    %105 = vector.load %arg1[%104, %c0_50, %c0_51] : memref<32x1x128xf32, #tpu.memory_space<vmem>>, vector<1x1x128xf32>
    %106 = vector.shape_cast %105 : vector<1x1x128xf32> to vector<1x128xf32>
    %c25 = arith.constant 25 : index
    %107 = memref.load %arg0[%c25] : memref<32xi32, #tpu.memory_space<smem>>
    %108 = arith.index_cast %107 : i32 to index
    %c0_52 = arith.constant 0 : index
    %c0_53 = arith.constant 0 : index
    %109 = vector.load %arg1[%108, %c0_52, %c0_53] : memref<32x1x128xf32, #tpu.memory_space<vmem>>, vector<1x1x128xf32>
    %110 = vector.shape_cast %109 : vector<1x1x128xf32> to vector<1x128xf32>
    %c26 = arith.constant 26 : index
    %111 = memref.load %arg0[%c26] : memref<32xi32, #tpu.memory_space<smem>>
    %112 = arith.index_cast %111 : i32 to index
    %c0_54 = arith.constant 0 : index
    %c0_55 = arith.constant 0 : index
    %113 = vector.load %arg1[%112, %c0_54, %c0_55] : memref<32x1x128xf32, #tpu.memory_space<vmem>>, vector<1x1x128xf32>
    %114 = vector.shape_cast %113 : vector<1x1x128xf32> to vector<1x128xf32>
    %c27 = arith.constant 27 : index
    %115 = memref.load %arg0[%c27] : memref<32xi32, #tpu.memory_space<smem>>
    %116 = arith.index_cast %115 : i32 to index
    %c0_56 = arith.constant 0 : index
    %c0_57 = arith.constant 0 : index
    %117 = vector.load %arg1[%116, %c0_56, %c0_57] : memref<32x1x128xf32, #tpu.memory_space<vmem>>, vector<1x1x128xf32>
    %118 = vector.shape_cast %117 : vector<1x1x128xf32> to vector<1x128xf32>
    %119 = tpu.concatenate %106, %110, %114, %118 in 0 : vector<1x128xf32>, vector<1x128xf32>, vector<1x128xf32>, vector<1x128xf32> -> vector<4x128xf32>
    %c28 = arith.constant 28 : index
    %120 = memref.load %arg0[%c28] : memref<32xi32, #tpu.memory_space<smem>>
    %121 = arith.index_cast %120 : i32 to index
    %c0_58 = arith.constant 0 : index
    %c0_59 = arith.constant 0 : index
    %122 = vector.load %arg1[%121, %c0_58, %c0_59] : memref<32x1x128xf32, #tpu.memory_space<vmem>>, vector<1x1x128xf32>
    %123 = vector.shape_cast %122 : vector<1x1x128xf32> to vector<1x128xf32>
    %c29 = arith.constant 29 : index
    %124 = memref.load %arg0[%c29] : memref<32xi32, #tpu.memory_space<smem>>
    %125 = arith.index_cast %124 : i32 to index
    %c0_60 = arith.constant 0 : index
    %c0_61 = arith.constant 0 : index
    %126 = vector.load %arg1[%125, %c0_60, %c0_61] : memref<32x1x128xf32, #tpu.memory_space<vmem>>, vector<1x1x128xf32>
    %127 = vector.shape_cast %126 : vector<1x1x128xf32> to vector<1x128xf32>
    %c30 = arith.constant 30 : index
    %128 = memref.load %arg0[%c30] : memref<32xi32, #tpu.memory_space<smem>>
    %129 = arith.index_cast %128 : i32 to index
    %c0_62 = arith.constant 0 : index
    %c0_63 = arith.constant 0 : index
    %130 = vector.load %arg1[%129, %c0_62, %c0_63] : memref<32x1x128xf32, #tpu.memory_space<vmem>>, vector<1x1x128xf32>
    %131 = vector.shape_cast %130 : vector<1x1x128xf32> to vector<1x128xf32>
    %c31 = arith.constant 31 : index
    %132 = memref.load %arg0[%c31] : memref<32xi32, #tpu.memory_space<smem>>
    %133 = arith.index_cast %132 : i32 to index
    %c0_64 = arith.constant 0 : index
    %c0_65 = arith.constant 0 : index
    %134 = vector.load %arg1[%133, %c0_64, %c0_65] : memref<32x1x128xf32, #tpu.memory_space<vmem>>, vector<1x1x128xf32>
    %135 = vector.shape_cast %134 : vector<1x1x128xf32> to vector<1x128xf32>
    %136 = tpu.concatenate %123, %127, %131, %135 in 0 : vector<1x128xf32>, vector<1x128xf32>, vector<1x128xf32>, vector<1x128xf32> -> vector<4x128xf32>
    %137 = tpu.iota {dimensions = array<i32: 1>} : vector<4x128xi32>
    %c64_i32 = arith.constant 64 : i32
    %138 = vector.broadcast %c64_i32 : i32 to vector<4x128xi32>
    %139 = arith.cmpi sge, %137, %138 : vector<4x128xi32>
    %c96_i32 = arith.constant 96 : i32
    %140 = vector.broadcast %c96_i32 : i32 to vector<4x128xi32>
    %141 = arith.cmpi slt, %137, %140 : vector<4x128xi32>
    %142 = arith.andi %139, %141 : vector<4x128xi1>
    %cst = arith.constant 0.000000e+00 : f32
    %143 = vector.broadcast %cst : f32 to vector<4x32xf32>
    %cst_66 = arith.constant 0.000000e+00 : f32
    %144 = vector.broadcast %cst_66 : f32 to vector<4x32xf32>
    %cst_67 = arith.constant dense<0.000000e+00> : vector<4x128xf32>
    %145 = tpu.matmul %143, %0, %cst_67 {dimension_numbers = #tpu.dot_dimension_numbers<[1], [0], [0], [1], [0, 0, 1, 1], [], []>} : vector<4x32xf32>, vector<32x128xf32>, vector<4x128xf32> -> vector<4x128xf32>
    %146 = arith.addf %17, %145 : vector<4x128xf32>
    %147 = math.tanh %146 : vector<4x128xf32>
    %148 = arith.negf %146 : vector<4x128xf32>
    %149 = math.exp %148 : vector<4x128xf32>
    %cst_68 = arith.constant 1.000000e+00 : f32
    %150 = vector.broadcast %cst_68 : f32 to vector<4x128xf32>
    %151 = arith.addf %150, %149 : vector<4x128xf32>
    %152 = arith.divf %150, %151 : vector<4x128xf32>
    %153 = arith.select %142, %147, %152 : vector<4x128xi1>, vector<4x128xf32>
    %154 = vector.extract_strided_slice %153 {offsets = [0, 0], sizes = [4, 32], strides = [1, 1]} : vector<4x128xf32> to vector<4x32xf32>
    %155 = vector.extract_strided_slice %153 {offsets = [0, 32], sizes = [4, 32], strides = [1, 1]} : vector<4x128xf32> to vector<4x32xf32>
    %156 = vector.extract_strided_slice %153 {offsets = [0, 64], sizes = [4, 32], strides = [1, 1]} : vector<4x128xf32> to vector<4x32xf32>
    %157 = vector.extract_strided_slice %153 {offsets = [0, 96], sizes = [4, 32], strides = [1, 1]} : vector<4x128xf32> to vector<4x32xf32>
    %158 = arith.mulf %155, %144 : vector<4x32xf32>
    %159 = arith.mulf %154, %156 : vector<4x32xf32>
    %160 = arith.addf %158, %159 : vector<4x32xf32>
    %161 = math.tanh %160 : vector<4x32xf32>
    %162 = arith.mulf %157, %161 : vector<4x32xf32>
    %cst_69 = arith.constant dense<0.000000e+00> : vector<4x128xf32>
    %163 = tpu.matmul %162, %0, %cst_69 {dimension_numbers = #tpu.dot_dimension_numbers<[1], [0], [0], [1], [0, 0, 1, 1], [], []>} : vector<4x32xf32>, vector<32x128xf32>, vector<4x128xf32> -> vector<4x128xf32>
    %164 = arith.addf %34, %163 : vector<4x128xf32>
    %165 = math.tanh %164 : vector<4x128xf32>
    %166 = arith.negf %164 : vector<4x128xf32>
    %167 = math.exp %166 : vector<4x128xf32>
    %cst_70 = arith.constant 1.000000e+00 : f32
    %168 = vector.broadcast %cst_70 : f32 to vector<4x128xf32>
    %169 = arith.addf %168, %167 : vector<4x128xf32>
    %170 = arith.divf %168, %169 : vector<4x128xf32>
    %171 = arith.select %142, %165, %170 : vector<4x128xi1>, vector<4x128xf32>
    %172 = vector.extract_strided_slice %171 {offsets = [0, 0], sizes = [4, 32], strides = [1, 1]} : vector<4x128xf32> to vector<4x32xf32>
    %173 = vector.extract_strided_slice %171 {offsets = [0, 32], sizes = [4, 32], strides = [1, 1]} : vector<4x128xf32> to vector<4x32xf32>
    %174 = vector.extract_strided_slice %171 {offsets = [0, 64], sizes = [4, 32], strides = [1, 1]} : vector<4x128xf32> to vector<4x32xf32>
    %175 = vector.extract_strided_slice %171 {offsets = [0, 96], sizes = [4, 32], strides = [1, 1]} : vector<4x128xf32> to vector<4x32xf32>
    %176 = arith.mulf %173, %160 : vector<4x32xf32>
    %177 = arith.mulf %172, %174 : vector<4x32xf32>
    %178 = arith.addf %176, %177 : vector<4x32xf32>
    %179 = math.tanh %178 : vector<4x32xf32>
    %180 = arith.mulf %175, %179 : vector<4x32xf32>
    %cst_71 = arith.constant dense<0.000000e+00> : vector<4x128xf32>
    %181 = tpu.matmul %180, %0, %cst_71 {dimension_numbers = #tpu.dot_dimension_numbers<[1], [0], [0], [1], [0, 0, 1, 1], [], []>} : vector<4x32xf32>, vector<32x128xf32>, vector<4x128xf32> -> vector<4x128xf32>
    %182 = arith.addf %51, %181 : vector<4x128xf32>
    %183 = math.tanh %182 : vector<4x128xf32>
    %184 = arith.negf %182 : vector<4x128xf32>
    %185 = math.exp %184 : vector<4x128xf32>
    %cst_72 = arith.constant 1.000000e+00 : f32
    %186 = vector.broadcast %cst_72 : f32 to vector<4x128xf32>
    %187 = arith.addf %186, %185 : vector<4x128xf32>
    %188 = arith.divf %186, %187 : vector<4x128xf32>
    %189 = arith.select %142, %183, %188 : vector<4x128xi1>, vector<4x128xf32>
    %190 = vector.extract_strided_slice %189 {offsets = [0, 0], sizes = [4, 32], strides = [1, 1]} : vector<4x128xf32> to vector<4x32xf32>
    %191 = vector.extract_strided_slice %189 {offsets = [0, 32], sizes = [4, 32], strides = [1, 1]} : vector<4x128xf32> to vector<4x32xf32>
    %192 = vector.extract_strided_slice %189 {offsets = [0, 64], sizes = [4, 32], strides = [1, 1]} : vector<4x128xf32> to vector<4x32xf32>
    %193 = vector.extract_strided_slice %189 {offsets = [0, 96], sizes = [4, 32], strides = [1, 1]} : vector<4x128xf32> to vector<4x32xf32>
    %194 = arith.mulf %191, %178 : vector<4x32xf32>
    %195 = arith.mulf %190, %192 : vector<4x32xf32>
    %196 = arith.addf %194, %195 : vector<4x32xf32>
    %197 = math.tanh %196 : vector<4x32xf32>
    %198 = arith.mulf %193, %197 : vector<4x32xf32>
    %cst_73 = arith.constant dense<0.000000e+00> : vector<4x128xf32>
    %199 = tpu.matmul %198, %0, %cst_73 {dimension_numbers = #tpu.dot_dimension_numbers<[1], [0], [0], [1], [0, 0, 1, 1], [], []>} : vector<4x32xf32>, vector<32x128xf32>, vector<4x128xf32> -> vector<4x128xf32>
    %200 = arith.addf %68, %199 : vector<4x128xf32>
    %201 = math.tanh %200 : vector<4x128xf32>
    %202 = arith.negf %200 : vector<4x128xf32>
    %203 = math.exp %202 : vector<4x128xf32>
    %cst_74 = arith.constant 1.000000e+00 : f32
    %204 = vector.broadcast %cst_74 : f32 to vector<4x128xf32>
    %205 = arith.addf %204, %203 : vector<4x128xf32>
    %206 = arith.divf %204, %205 : vector<4x128xf32>
    %207 = arith.select %142, %201, %206 : vector<4x128xi1>, vector<4x128xf32>
    %208 = vector.extract_strided_slice %207 {offsets = [0, 0], sizes = [4, 32], strides = [1, 1]} : vector<4x128xf32> to vector<4x32xf32>
    %209 = vector.extract_strided_slice %207 {offsets = [0, 32], sizes = [4, 32], strides = [1, 1]} : vector<4x128xf32> to vector<4x32xf32>
    %210 = vector.extract_strided_slice %207 {offsets = [0, 64], sizes = [4, 32], strides = [1, 1]} : vector<4x128xf32> to vector<4x32xf32>
    %211 = vector.extract_strided_slice %207 {offsets = [0, 96], sizes = [4, 32], strides = [1, 1]} : vector<4x128xf32> to vector<4x32xf32>
    %212 = arith.mulf %209, %196 : vector<4x32xf32>
    %213 = arith.mulf %208, %210 : vector<4x32xf32>
    %214 = arith.addf %212, %213 : vector<4x32xf32>
    %215 = math.tanh %214 : vector<4x32xf32>
    %216 = arith.mulf %211, %215 : vector<4x32xf32>
    %cst_75 = arith.constant dense<0.000000e+00> : vector<4x128xf32>
    %217 = tpu.matmul %216, %0, %cst_75 {dimension_numbers = #tpu.dot_dimension_numbers<[1], [0], [0], [1], [0, 0, 1, 1], [], []>} : vector<4x32xf32>, vector<32x128xf32>, vector<4x128xf32> -> vector<4x128xf32>
    %218 = arith.addf %85, %217 : vector<4x128xf32>
    %219 = math.tanh %218 : vector<4x128xf32>
    %220 = arith.negf %218 : vector<4x128xf32>
    %221 = math.exp %220 : vector<4x128xf32>
    %cst_76 = arith.constant 1.000000e+00 : f32
    %222 = vector.broadcast %cst_76 : f32 to vector<4x128xf32>
    %223 = arith.addf %222, %221 : vector<4x128xf32>
    %224 = arith.divf %222, %223 : vector<4x128xf32>
    %225 = arith.select %142, %219, %224 : vector<4x128xi1>, vector<4x128xf32>
    %226 = vector.extract_strided_slice %225 {offsets = [0, 0], sizes = [4, 32], strides = [1, 1]} : vector<4x128xf32> to vector<4x32xf32>
    %227 = vector.extract_strided_slice %225 {offsets = [0, 32], sizes = [4, 32], strides = [1, 1]} : vector<4x128xf32> to vector<4x32xf32>
    %228 = vector.extract_strided_slice %225 {offsets = [0, 64], sizes = [4, 32], strides = [1, 1]} : vector<4x128xf32> to vector<4x32xf32>
    %229 = vector.extract_strided_slice %225 {offsets = [0, 96], sizes = [4, 32], strides = [1, 1]} : vector<4x128xf32> to vector<4x32xf32>
    %230 = arith.mulf %227, %214 : vector<4x32xf32>
    %231 = arith.mulf %226, %228 : vector<4x32xf32>
    %232 = arith.addf %230, %231 : vector<4x32xf32>
    %233 = math.tanh %232 : vector<4x32xf32>
    %234 = arith.mulf %229, %233 : vector<4x32xf32>
    %cst_77 = arith.constant dense<0.000000e+00> : vector<4x128xf32>
    %235 = tpu.matmul %234, %0, %cst_77 {dimension_numbers = #tpu.dot_dimension_numbers<[1], [0], [0], [1], [0, 0, 1, 1], [], []>} : vector<4x32xf32>, vector<32x128xf32>, vector<4x128xf32> -> vector<4x128xf32>
    %236 = arith.addf %102, %235 : vector<4x128xf32>
    %237 = math.tanh %236 : vector<4x128xf32>
    %238 = arith.negf %236 : vector<4x128xf32>
    %239 = math.exp %238 : vector<4x128xf32>
    %cst_78 = arith.constant 1.000000e+00 : f32
    %240 = vector.broadcast %cst_78 : f32 to vector<4x128xf32>
    %241 = arith.addf %240, %239 : vector<4x128xf32>
    %242 = arith.divf %240, %241 : vector<4x128xf32>
    %243 = arith.select %142, %237, %242 : vector<4x128xi1>, vector<4x128xf32>
    %244 = vector.extract_strided_slice %243 {offsets = [0, 0], sizes = [4, 32], strides = [1, 1]} : vector<4x128xf32> to vector<4x32xf32>
    %245 = vector.extract_strided_slice %243 {offsets = [0, 32], sizes = [4, 32], strides = [1, 1]} : vector<4x128xf32> to vector<4x32xf32>
    %246 = vector.extract_strided_slice %243 {offsets = [0, 64], sizes = [4, 32], strides = [1, 1]} : vector<4x128xf32> to vector<4x32xf32>
    %247 = vector.extract_strided_slice %243 {offsets = [0, 96], sizes = [4, 32], strides = [1, 1]} : vector<4x128xf32> to vector<4x32xf32>
    %248 = arith.mulf %245, %232 : vector<4x32xf32>
    %249 = arith.mulf %244, %246 : vector<4x32xf32>
    %250 = arith.addf %248, %249 : vector<4x32xf32>
    %251 = math.tanh %250 : vector<4x32xf32>
    %252 = arith.mulf %247, %251 : vector<4x32xf32>
    %cst_79 = arith.constant dense<0.000000e+00> : vector<4x128xf32>
    %253 = tpu.matmul %252, %0, %cst_79 {dimension_numbers = #tpu.dot_dimension_numbers<[1], [0], [0], [1], [0, 0, 1, 1], [], []>} : vector<4x32xf32>, vector<32x128xf32>, vector<4x128xf32> -> vector<4x128xf32>
    %254 = arith.addf %119, %253 : vector<4x128xf32>
    %255 = math.tanh %254 : vector<4x128xf32>
    %256 = arith.negf %254 : vector<4x128xf32>
    %257 = math.exp %256 : vector<4x128xf32>
    %cst_80 = arith.constant 1.000000e+00 : f32
    %258 = vector.broadcast %cst_80 : f32 to vector<4x128xf32>
    %259 = arith.addf %258, %257 : vector<4x128xf32>
    %260 = arith.divf %258, %259 : vector<4x128xf32>
    %261 = arith.select %142, %255, %260 : vector<4x128xi1>, vector<4x128xf32>
    %262 = vector.extract_strided_slice %261 {offsets = [0, 0], sizes = [4, 32], strides = [1, 1]} : vector<4x128xf32> to vector<4x32xf32>
    %263 = vector.extract_strided_slice %261 {offsets = [0, 32], sizes = [4, 32], strides = [1, 1]} : vector<4x128xf32> to vector<4x32xf32>
    %264 = vector.extract_strided_slice %261 {offsets = [0, 64], sizes = [4, 32], strides = [1, 1]} : vector<4x128xf32> to vector<4x32xf32>
    %265 = vector.extract_strided_slice %261 {offsets = [0, 96], sizes = [4, 32], strides = [1, 1]} : vector<4x128xf32> to vector<4x32xf32>
    %266 = arith.mulf %263, %250 : vector<4x32xf32>
    %267 = arith.mulf %262, %264 : vector<4x32xf32>
    %268 = arith.addf %266, %267 : vector<4x32xf32>
    %269 = math.tanh %268 : vector<4x32xf32>
    %270 = arith.mulf %265, %269 : vector<4x32xf32>
    %cst_81 = arith.constant dense<0.000000e+00> : vector<4x128xf32>
    %271 = tpu.matmul %270, %0, %cst_81 {dimension_numbers = #tpu.dot_dimension_numbers<[1], [0], [0], [1], [0, 0, 1, 1], [], []>} : vector<4x32xf32>, vector<32x128xf32>, vector<4x128xf32> -> vector<4x128xf32>
    %272 = arith.addf %136, %271 : vector<4x128xf32>
    %273 = math.tanh %272 : vector<4x128xf32>
    %274 = arith.negf %272 : vector<4x128xf32>
    %275 = math.exp %274 : vector<4x128xf32>
    %cst_82 = arith.constant 1.000000e+00 : f32
    %276 = vector.broadcast %cst_82 : f32 to vector<4x128xf32>
    %277 = arith.addf %276, %275 : vector<4x128xf32>
    %278 = arith.divf %276, %277 : vector<4x128xf32>
    %279 = arith.select %142, %273, %278 : vector<4x128xi1>, vector<4x128xf32>
    %280 = vector.extract_strided_slice %279 {offsets = [0, 0], sizes = [4, 32], strides = [1, 1]} : vector<4x128xf32> to vector<4x32xf32>
    %281 = vector.extract_strided_slice %279 {offsets = [0, 32], sizes = [4, 32], strides = [1, 1]} : vector<4x128xf32> to vector<4x32xf32>
    %282 = vector.extract_strided_slice %279 {offsets = [0, 64], sizes = [4, 32], strides = [1, 1]} : vector<4x128xf32> to vector<4x32xf32>
    %283 = vector.extract_strided_slice %279 {offsets = [0, 96], sizes = [4, 32], strides = [1, 1]} : vector<4x128xf32> to vector<4x32xf32>
    %284 = arith.mulf %281, %268 : vector<4x32xf32>
    %285 = arith.mulf %280, %282 : vector<4x32xf32>
    %286 = arith.addf %284, %285 : vector<4x32xf32>
    %287 = math.tanh %286 : vector<4x32xf32>
    %288 = arith.mulf %283, %287 : vector<4x32xf32>
    %c0_83 = arith.constant 0 : index
    %c0_84 = arith.constant 0 : index
    %289 = vector.load %arg3[%c0_83, %c0_84] : memref<32x12xf32, #tpu.memory_space<vmem>>, vector<32x12xf32>
    %cst_85 = arith.constant dense<0.000000e+00> : vector<4x12xf32>
    %290 = tpu.matmul %288, %289, %cst_85 {dimension_numbers = #tpu.dot_dimension_numbers<[1], [0], [0], [1], [0, 0, 1, 1], [], []>} : vector<4x32xf32>, vector<32x12xf32>, vector<4x12xf32> -> vector<4x12xf32>
    %c0_86 = arith.constant 0 : index
    %c0_87 = arith.constant 0 : index
    %291 = vector.load %arg4[%c0_86, %c0_87] : memref<1x12xf32, #tpu.memory_space<vmem>>, vector<1x12xf32>
    %292 = vector.broadcast %291 : vector<1x12xf32> to vector<4x12xf32>
    %293 = arith.addf %290, %292 : vector<4x12xf32>
    %c0_88 = arith.constant 0 : index
    %c0_89 = arith.constant 0 : index
    %294 = vector.load %arg5[%c0_88, %c0_89] : memref<4x12xf32, #tpu.memory_space<vmem>>, vector<4x12xf32>
    tpu.vector_store %arg5[%c0_88, %c0_89], %293 {strides = array<i32>} : memref<4x12xf32, #tpu.memory_space<vmem>>, vector<4x12xf32>,
    return
  }
}

</mosaic_0001>

<llo_original>
// kernel: lstm_1_in_2_out.1
$region0: #{lstm_1_in_2_out.1}
  #allocation0 [shape = 'u32[]', space=smem, size = 0x4, offset = 0x4, fixed_abs, tag = 'smem constant byte address 0x4 - core index']
  #allocation1 [shape = 'u32[144,128]{1,0:T(1,128)}', space=vmem, size = 0x12000, scoped, tag = 'internal scratch']
  %s0 = inlined_call_operand.vmem [shape: s32[32], index: 0, kind: input, shape index: {}]
  %s1 = inlined_call_operand.vmem [shape: f32[32,1,128], index: 1, kind: input, shape index: {}]
  %s2 = inlined_call_operand.vmem [shape: f32[32,128], index: 2, kind: input, shape index: {}]
  %s3 = inlined_call_operand.vmem [shape: f32[32,12], index: 3, kind: input, shape index: {}]
  %s4 = inlined_call_operand.vmem [shape: f32[1,12], index: 4, kind: input, shape index: {}]
  %s5 = inlined_call_operand.vmem [shape: f32[4,12], index: 5, kind: output, shape index: {}]
  %s6 = sld [smem:[#allocation0]]
  $region34: #{lstm_1_in_2_out.1} parent=0
    _
  %s8 = ssub.s32 1, %s6
  %s9 = scalar_select 0, %s8, %s6
  $region1: #{lstm_1_in_2_out.1} parent=0
    #allocation2 [shape = 'u8[512]{0}', space=smem, size = 0x200, scoped, tag = 'input window, operand 0, single buffered']
    #allocation3 [shape = 's32[1]{0}', space=sflag, size = 0x4, scoped, tag = 'scoped memory for lstm_1_in_2_out.1']
    %10 = vsyncpa [#allocation3], 0
    // Predicated region
    $region2: #{lstm_1_in_2_out.1} parent=1 // pred_check
      _
    $region3: #{lstm_1_in_2_out.1} parent=1 // pred_check_branch
      %12 = sbr.rel (0) target = $region5
    $region4: #{lstm_1_in_2_out.1} parent=1 // pred_region
      %s14 = ssub.s32 16, 16
      %15 = vsyncadd [#allocation3], %s14
      %s17 = sshll.u32 %s0, 4
      %s18 = int_to_ptr.vmem [resolvable:$true] %s17
      %20 = dma.vmem_to_smem %s18, 16, [#allocation2], [#allocation3]
    $region5: #{lstm_1_in_2_out.1} parent=1 // pred_fallthru
      _
    // Predicated region
    $region6: #{lstm_1_in_2_out.1} parent=1 // pred_check
      _
    $region7: #{lstm_1_in_2_out.1} parent=1 // pred_check_branch
      %22 = sbr.rel (0) target = $region9
    $region8: #{lstm_1_in_2_out.1} parent=1 // pred_region
      _
    $region9: #{lstm_1_in_2_out.1} parent=1 // pred_fallthru
      _
    // Predicated region
    $region10: #{lstm_1_in_2_out.1} parent=1 // pred_check
      _
    $region11: #{lstm_1_in_2_out.1} parent=1 // pred_check_branch
      %24 = sbr.rel (0) target = $region13
    $region12: #{lstm_1_in_2_out.1} parent=1 // pred_region
      _
    $region13: #{lstm_1_in_2_out.1} parent=1 // pred_fallthru
      _
    // Predicated region
    $region14: #{lstm_1_in_2_out.1} parent=1 // pred_check
      _
    $region15: #{lstm_1_in_2_out.1} parent=1 // pred_check_branch
      %26 = sbr.rel (0) target = $region17
    $region16: #{lstm_1_in_2_out.1} parent=1 // pred_region
      _
    $region17: #{lstm_1_in_2_out.1} parent=1 // pred_fallthru
      _
    // Predicated region
    $region18: #{lstm_1_in_2_out.1} parent=1 // pred_check
      _
    $region19: #{lstm_1_in_2_out.1} parent=1 // pred_check_branch
      %28 = sbr.rel (0) target = $region21
    $region20: #{lstm_1_in_2_out.1} parent=1 // pred_region
      _
    $region21: #{lstm_1_in_2_out.1} parent=1 // pred_fallthru
      _
    // Predicated region
    $region22: #{lstm_1_in_2_out.1} parent=1 // pred_check
      _
    $region23: #{lstm_1_in_2_out.1} parent=1 // pred_check_branch
      %30 = sbr.rel (0) target = $region25
    $region24: #{lstm_1_in_2_out.1} parent=1 // pred_region
      %31 = dma.done [#allocation3], 16
    $region25: #{lstm_1_in_2_out.1} parent=1 // pred_fallthru
      _
    %32 = sfence
    %v33 = vld [vmem:[%s2] sm:$0xff]
    %v34 = vld [vmem:[%s2 + $0x8] sm:$0xff]
    %v35 = vld [vmem:[%s2 + $0x10] sm:$0xff]
    %v36 = vld [vmem:[%s2 + $0x18] sm:$0xff]
    %s37 = sld [smem:[#allocation2]]
    %s38 = scalar_lea.vmem %s1, %s37
    %v39 = vld [vmem:[%s38] sm:$0x1]
    %s40 = sld [smem:[#allocation2 + $0x1]]
    %s41 = scalar_lea.vmem %s1, %s40
    %v42 = vld [vmem:[%s41] sm:$0x1]
    %s43 = sld [smem:[#allocation2 + $0x2]]
    %s44 = scalar_lea.vmem %s1, %s43
    %v45 = vld [vmem:[%s44] sm:$0x1]
    %s46 = sld [smem:[#allocation2 + $0x3]]
    %s47 = scalar_lea.vmem %s1, %s46
    %v48 = vld [vmem:[%s47] sm:$0x1]
    %v50 = vlaneseq
    %v51 = vshrl.u32 %v50, 7
    %v52 = vsub.s32 0, %v51
    %v53 = vrot.slane %v42, %v52
    %v56 = vlaneseq
    %v57 = vshrl.u32 %v56, 7
    %v58 = vsub.s32 0, %v57
    %v59 = vrot.slane %v45, %v58
    %v62 = vlaneseq
    %v63 = vshrl.u32 %v62, 7
    %v64 = vsub.s32 0, %v63
    %v65 = vrot.slane %v48, %v64
    %vm67 = vcmask 1040384
    %v68 = vsel %vm67, %v39, %v53
    %vm69 = vcmask 1041408
    %v70 = vsel %vm69, %v68, %v59
    %vm71 = vcmask 1042432
    %v72 = vsel %vm71, %v70, %v65
    %s73 = sld [smem:[#allocation2 + $0x4]]
    %s74 = scalar_lea.vmem %s1, %s73
    %v75 = vld [vmem:[%s74] sm:$0x1]
    %s76 = sld [smem:[#allocation2 + $0x5]]
    %s77 = scalar_lea.vmem %s1, %s76
    %v78 = vld [vmem:[%s77] sm:$0x1]
    %s79 = sld [smem:[#allocation2 + $0x6]]
    %s80 = scalar_lea.vmem %s1, %s79
    %v81 = vld [vmem:[%s80] sm:$0x1]
    %s82 = sld [smem:[#allocation2 + $0x7]]
    %s83 = scalar_lea.vmem %s1, %s82
    %v84 = vld [vmem:[%s83] sm:$0x1]
    %v86 = vlaneseq
    %v87 = vshrl.u32 %v86, 7
    %v88 = vsub.s32 0, %v87
    %v89 = vrot.slane %v78, %v88
    %v92 = vlaneseq
    %v93 = vshrl.u32 %v92, 7
    %v94 = vsub.s32 0, %v93
    %v95 = vrot.slane %v81, %v94
    %v98 = vlaneseq
    %v99 = vshrl.u32 %v98, 7
    %v100 = vsub.s32 0, %v99
    %v101 = vrot.slane %v84, %v100
    %v103 = vsel %vm67, %v75, %v89
    %v104 = vsel %vm69, %v103, %v95
    %v105 = vsel %vm71, %v104, %v101
    %s106 = sld [smem:[#allocation2 + $0x8]]
    %s107 = scalar_lea.vmem %s1, %s106
    %v108 = vld [vmem:[%s107] sm:$0x1]
    %s109 = sld [smem:[#allocation2 + $0x9]]
    %s110 = scalar_lea.vmem %s1, %s109
    %v111 = vld [vmem:[%s110] sm:$0x1]
    %s112 = sld [smem:[#allocation2 + $0xa]]
    %s113 = scalar_lea.vmem %s1, %s112
    %v114 = vld [vmem:[%s113] sm:$0x1]
    %s115 = sld [smem:[#allocation2 + $0xb]]
    %s116 = scalar_lea.vmem %s1, %s115
    %v117 = vld [vmem:[%s116] sm:$0x1]
    %v119 = vlaneseq
    %v120 = vshrl.u32 %v119, 7
    %v121 = vsub.s32 0, %v120
    %v122 = vrot.slane %v111, %v121
    %v125 = vlaneseq
    %v126 = vshrl.u32 %v125, 7
    %v127 = vsub.s32 0, %v126
    %v128 = vrot.slane %v114, %v127
    %v131 = vlaneseq
    %v132 = vshrl.u32 %v131, 7
    %v133 = vsub.s32 0, %v132
    %v134 = vrot.slane %v117, %v133
    %v136 = vsel %vm67, %v108, %v122
    %v137 = vsel %vm69, %v136, %v128
    %v138 = vsel %vm71, %v137, %v134
    %s139 = sld [smem:[#allocation2 + $0xc]]
    %s140 = scalar_lea.vmem %s1, %s139
    %v141 = vld [vmem:[%s140] sm:$0x1]
    %s142 = sld [smem:[#allocation2 + $0xd]]
    %s143 = scalar_lea.vmem %s1, %s142
    %v144 = vld [vmem:[%s143] sm:$0x1]
    %s145 = sld [smem:[#allocation2 + $0xe]]
    %s146 = scalar_lea.vmem %s1, %s145
    %v147 = vld [vmem:[%s146] sm:$0x1]
    %s148 = sld [smem:[#allocation2 + $0xf]]
    %s149 = scalar_lea.vmem %s1, %s148
    %v150 = vld [vmem:[%s149] sm:$0x1]
    %v152 = vlaneseq
    %v153 = vshrl.u32 %v152, 7
    %v154 = vsub.s32 0, %v153
    %v155 = vrot.slane %v144, %v154
    %v158 = vlaneseq
    %v159 = vshrl.u32 %v158, 7
    %v160 = vsub.s32 0, %v159
    %v161 = vrot.slane %v147, %v160
    %v164 = vlaneseq
    %v165 = vshrl.u32 %v164, 7
    %v166 = vsub.s32 0, %v165
    %v167 = vrot.slane %v150, %v166
    %v169 = vsel %vm67, %v141, %v155
    %v170 = vsel %vm69, %v169, %v161
    %v171 = vsel %vm71, %v170, %v167
    %s172 = sld [smem:[#allocation2 + $0x10]]
    %s173 = scalar_lea.vmem %s1, %s172
    %v174 = vld [vmem:[%s173] sm:$0x1]
    %s175 = sld [smem:[#allocation2 + $0x11]]
    %s176 = scalar_lea.vmem %s1, %s175
    %v177 = vld [vmem:[%s176] sm:$0x1]
    %s178 = sld [smem:[#allocation2 + $0x12]]
    %s179 = scalar_lea.vmem %s1, %s178
    %v180 = vld [vmem:[%s179] sm:$0x1]
    %s181 = sld [smem:[#allocation2 + $0x13]]
    %s182 = scalar_lea.vmem %s1, %s181
    %v183 = vld [vmem:[%s182] sm:$0x1]
    %v185 = vlaneseq
    %v186 = vshrl.u32 %v185, 7
    %v187 = vsub.s32 0, %v186
    %v188 = vrot.slane %v177, %v187
    %v191 = vlaneseq
    %v192 = vshrl.u32 %v191, 7
    %v193 = vsub.s32 0, %v192
    %v194 = vrot.slane %v180, %v193
    %v197 = vlaneseq
    %v198 = vshrl.u32 %v197, 7
    %v199 = vsub.s32 0, %v198
    %v200 = vrot.slane %v183, %v199
    %v202 = vsel %vm67, %v174, %v188
    %v203 = vsel %vm69, %v202, %v194
    %v204 = vsel %vm71, %v203, %v200
    %s205 = sld [smem:[#allocation2 + $0x14]]
    %s206 = scalar_lea.vmem %s1, %s205
    %v207 = vld [vmem:[%s206] sm:$0x1]
    %s208 = sld [smem:[#allocation2 + $0x15]]
    %s209 = scalar_lea.vmem %s1, %s208
    %v210 = vld [vmem:[%s209] sm:$0x1]
    %s211 = sld [smem:[#allocation2 + $0x16]]
    %s212 = scalar_lea.vmem %s1, %s211
    %v213 = vld [vmem:[%s212] sm:$0x1]
    %s214 = sld [smem:[#allocation2 + $0x17]]
    %s215 = scalar_lea.vmem %s1, %s214
    %v216 = vld [vmem:[%s215] sm:$0x1]
    %v218 = vlaneseq
    %v219 = vshrl.u32 %v218, 7
    %v220 = vsub.s32 0, %v219
    %v221 = vrot.slane %v210, %v220
    %v224 = vlaneseq
    %v225 = vshrl.u32 %v224, 7
    %v226 = vsub.s32 0, %v225
    %v227 = vrot.slane %v213, %v226
    %v230 = vlaneseq
    %v231 = vshrl.u32 %v230, 7
    %v232 = vsub.s32 0, %v231
    %v233 = vrot.slane %v216, %v232
    %v235 = vsel %vm67, %v207, %v221
    %v236 = vsel %vm69, %v235, %v227
    %v237 = vsel %vm71, %v236, %v233
    %s238 = sld [smem:[#allocation2 + $0x18]]
    %s239 = scalar_lea.vmem %s1, %s238
    %v240 = vld [vmem:[%s239] sm:$0x1]
    %s241 = sld [smem:[#allocation2 + $0x19]]
    %s242 = scalar_lea.vmem %s1, %s241
    %v243 = vld [vmem:[%s242] sm:$0x1]
    %s244 = sld [smem:[#allocation2 + $0x1a]]
    %s245 = scalar_lea.vmem %s1, %s244
    %v246 = vld [vmem:[%s245] sm:$0x1]
    %s247 = sld [smem:[#allocation2 + $0x1b]]
    %s248 = scalar_lea.vmem %s1, %s247
    %v249 = vld [vmem:[%s248] sm:$0x1]
    %v251 = vlaneseq
    %v252 = vshrl.u32 %v251, 7
    %v253 = vsub.s32 0, %v252
    %v254 = vrot.slane %v243, %v253
    %v257 = vlaneseq
    %v258 = vshrl.u32 %v257, 7
    %v259 = vsub.s32 0, %v258
    %v260 = vrot.slane %v246, %v259
    %v263 = vlaneseq
    %v264 = vshrl.u32 %v263, 7
    %v265 = vsub.s32 0, %v264
    %v266 = vrot.slane %v249, %v265
    %v268 = vsel %vm67, %v240, %v254
    %v269 = vsel %vm69, %v268, %v260
    %v270 = vsel %vm71, %v269, %v266
    %s271 = sld [smem:[#allocation2 + $0x1c]]
    %s272 = scalar_lea.vmem %s1, %s271
    %v273 = vld [vmem:[%s272] sm:$0x1]
    %s274 = sld [smem:[#allocation2 + $0x1d]]
    %s275 = scalar_lea.vmem %s1, %s274
    %v276 = vld [vmem:[%s275] sm:$0x1]
    %s277 = sld [smem:[#allocation2 + $0x1e]]
    %s278 = scalar_lea.vmem %s1, %s277
    %v279 = vld [vmem:[%s278] sm:$0x1]
    %s280 = sld [smem:[#allocation2 + $0x1f]]
    %s281 = scalar_lea.vmem %s1, %s280
    %v282 = vld [vmem:[%s281] sm:$0x1]
    %v284 = vlaneseq
    %v285 = vshrl.u32 %v284, 7
    %v286 = vsub.s32 0, %v285
    %v287 = vrot.slane %v276, %v286
    %v290 = vlaneseq
    %v291 = vshrl.u32 %v290, 7
    %v292 = vsub.s32 0, %v291
    %v293 = vrot.slane %v279, %v292
    %v296 = vlaneseq
    %v297 = vshrl.u32 %v296, 7
    %v298 = vsub.s32 0, %v297
    %v299 = vrot.slane %v282, %v298
    %v301 = vsel %vm67, %v273, %v287
    %v302 = vsel %vm69, %v301, %v293
    %v303 = vsel %vm71, %v302, %v299
    %v304 = vlaneseq
    %v305 = vand.u32 %v304, 127
    %vm306 = vcmp.ge.s32.totalorder %v305, 64
    %vm307 = vcmp.lt.s32.totalorder %v305, 96
    %vm308 = vmand %vm306, %vm307
    %vm309 = vcmask 261120
    %v311 = vsel %vm309, 0.0, 0
    %313 = vmatprep.subr.mxu0 0.0
    %314 = vmatpush1.msra.mxu0 0.0
    %315 = vmatprep.subr.mxu0 0.0
    %316 = vmatpush1.msra.mxu0 0.0
    %317 = vmatprep.subr.mxu0 0.0
    %318 = vmatpush1.msra.mxu0 0.0
    %319 = vmatprep.subr.mxu0 0.0
    %320 = vmatpush1.msra.mxu0 0.0
    %321 = vmatprep.subr.mxu0 0.0
    %322 = vmatpush1.msra.mxu0 0.0
    %323 = vmatprep.subr.mxu0 0.0
    %324 = vmatpush1.msra.mxu0 0.0
    %325 = vmatprep.subr.mxu0 0.0
    %326 = vmatpush1.msra.mxu0 0.0
    %327 = vmatprep.subr.mxu0 0.0
    %328 = vmatpush1.msra.mxu0 0.0
    %329 = vmatprep.subr.mxu0 0.0
    %330 = vmatpush1.msra.mxu0 0.0
    %331 = vmatprep.subr.mxu0 0.0
    %332 = vmatpush1.msra.mxu0 0.0
    %333 = vmatprep.subr.mxu0 0.0
    %334 = vmatpush1.msra.mxu0 0.0
    %335 = vmatprep.subr.mxu0 0.0
    %336 = vmatpush1.msra.mxu0 0.0
    %337 = vmatprep.subr.mxu0 0.0
    %338 = vmatpush1.msra.mxu0 %v36
    %339 = vmatprep.subr.mxu0 0.0
    %340 = vmatpush1.msra.mxu0 %v35
    %341 = vmatprep.subr.mxu0 0.0
    %342 = vmatpush1.msra.mxu0 %v34
    %343 = vmatprep.subr.mxu0 0.0
    %344 = vmatpush1.msra.mxu0 %v33
    %345 = vmatprep.subr.mxu0 0.0
    %346 = vmatpush2.msra.mxu0 0.0
    %347 = vmatprep.subr.mxu0 0.0
    %348 = vmatpush2.msra.mxu0 0.0
    %349 = vmatprep.subr.mxu0 0.0
    %350 = vmatpush2.msra.mxu0 0.0
    %351 = vmatprep.subr.mxu0 0.0
    %352 = vmatpush2.msra.mxu0 0.0
    %353 = vmatprep.subr.mxu0 0.0
    %354 = vmatpush2.msra.mxu0 0.0
    %355 = vmatprep.subr.mxu0 0.0
    %356 = vmatpush2.msra.mxu0 0.0
    %357 = vmatprep.subr.mxu0 0.0
    %358 = vmatpush2.msra.mxu0 0.0
    %359 = vmatprep.subr.mxu0 0.0
    %360 = vmatpush2.msra.mxu0 0.0
    %361 = vmatprep.subr.mxu0 0.0
    %362 = vmatpush2.msra.mxu0 0.0
    %363 = vmatprep.subr.mxu0 0.0
    %364 = vmatpush2.msra.mxu0 0.0
    %365 = vmatprep.subr.mxu0 0.0
    %366 = vmatpush2.msra.mxu0 0.0
    %367 = vmatprep.subr.mxu0 0.0
    %368 = vmatpush2.msra.mxu0 0.0
    %369 = vmatprep.subr.mxu0 0.0
    %370 = vmatpush2.msra.mxu0 0.0
    %371 = vmatprep.subr.mxu0 0.0
    %372 = vmatpush2.msra.mxu0 0.0
    %373 = vmatprep.subr.mxu0 0.0
    %374 = vmatpush2.msra.mxu0 0.0
    %375 = vmatprep.subr.mxu0 0.0
    %376 = vmatpush2.msra.mxu0 0.0
    %377 = vmatprep.mubr.f32.mxu0 0.0
    %378 = vmatmul.mubr.f32.gmra.mxu0 %v311
    %v379 = vpop.f32.mrf.mxu0
    %v380 = vadd.f32 0.0, %v379
    %v381 = vpop.f32.mrf.mxu0
    %382 = vdwg.mxu0
    %v383 = vadd.f32 %v72, %v380
    %v384 = vtanh.pop %v383
    %v385 = vxor.u32 %v383, 2147483648
    %v386 = vmul.f32 %v385, 1.442695
    %v387 = vpow.pop %v386
    %v388 = vadd.f32 %v387, 1.0
    %v389 = vrcp.pop %v388
    %v390 = vmul.f32 1.0, %v389
    %v391 = vsel %vm308, %v384, %v390
    %v392 = vmul.f32 %v391, 0.0
    %394 = vrot.lane.b32.xlu0 %v391, 64
    %v395 = vpop.permute.xlu0 %394
    %v397 = vmul.f32 %v391, %v395
    %399 = vrot.lane.b32.xlu0 %v397, 32
    %v400 = vpop.permute.xlu0 %399
    %v402 = vadd.f32 %v392, %v400
    %v403 = vtanh.pop %v402
    %405 = vrot.lane.b32.xlu0 %v403, 64
    %v406 = vpop.permute.xlu0 %405
    %v408 = vmul.f32 %v391, %v406
    %410 = vrot.lane.b32.xlu0 %v408, 32
    %v411 = vpop.permute.xlu0 %410
    %v412 = vsel %vm309, %v411, 0
    %414 = vmatprep.subr.mxu0 0.0
    %415 = vmatpush1.msra.mxu0 0.0
    %416 = vmatprep.subr.mxu0 0.0
    %417 = vmatpush1.msra.mxu0 0.0
    %418 = vmatprep.subr.mxu0 0.0
    %419 = vmatpush1.msra.mxu0 0.0
    %420 = vmatprep.subr.mxu0 0.0
    %421 = vmatpush1.msra.mxu0 0.0
    %422 = vmatprep.subr.mxu0 0.0
    %423 = vmatpush1.msra.mxu0 0.0
    %424 = vmatprep.subr.mxu0 0.0
    %425 = vmatpush1.msra.mxu0 0.0
    %426 = vmatprep.subr.mxu0 0.0
    %427 = vmatpush1.msra.mxu0 0.0
    %428 = vmatprep.subr.mxu0 0.0
    %429 = vmatpush1.msra.mxu0 0.0
    %430 = vmatprep.subr.mxu0 0.0
    %431 = vmatpush1.msra.mxu0 0.0
    %432 = vmatprep.subr.mxu0 0.0
    %433 = vmatpush1.msra.mxu0 0.0
    %434 = vmatprep.subr.mxu0 0.0
    %435 = vmatpush1.msra.mxu0 0.0
    %436 = vmatprep.subr.mxu0 0.0
    %437 = vmatpush1.msra.mxu0 0.0
    %438 = vmatprep.subr.mxu0 0.0
    %439 = vmatpush1.msra.mxu0 %v36
    %440 = vmatprep.subr.mxu0 0.0
    %441 = vmatpush1.msra.mxu0 %v35
    %442 = vmatprep.subr.mxu0 0.0
    %443 = vmatpush1.msra.mxu0 %v34
    %444 = vmatprep.subr.mxu0 0.0
    %445 = vmatpush1.msra.mxu0 %v33
    %446 = vmatprep.subr.mxu0 0.0
    %447 = vmatpush2.msra.mxu0 0.0
    %448 = vmatprep.subr.mxu0 0.0
    %449 = vmatpush2.msra.mxu0 0.0
    %450 = vmatprep.subr.mxu0 0.0
    %451 = vmatpush2.msra.mxu0 0.0
    %452 = vmatprep.subr.mxu0 0.0
    %453 = vmatpush2.msra.mxu0 0.0
    %454 = vmatprep.subr.mxu0 0.0
    %455 = vmatpush2.msra.mxu0 0.0
    %456 = vmatprep.subr.mxu0 0.0
    %457 = vmatpush2.msra.mxu0 0.0
    %458 = vmatprep.subr.mxu0 0.0
    %459 = vmatpush2.msra.mxu0 0.0
    %460 = vmatprep.subr.mxu0 0.0
    %461 = vmatpush2.msra.mxu0 0.0
    %462 = vmatprep.subr.mxu0 0.0
    %463 = vmatpush2.msra.mxu0 0.0
    %464 = vmatprep.subr.mxu0 0.0
    %465 = vmatpush2.msra.mxu0 0.0
    %466 = vmatprep.subr.mxu0 0.0
    %467 = vmatpush2.msra.mxu0 0.0
    %468 = vmatprep.subr.mxu0 0.0
    %469 = vmatpush2.msra.mxu0 0.0
    %470 = vmatprep.subr.mxu0 0.0
    %471 = vmatpush2.msra.mxu0 0.0
    %472 = vmatprep.subr.mxu0 0.0
    %473 = vmatpush2.msra.mxu0 0.0
    %474 = vmatprep.subr.mxu0 0.0
    %475 = vmatpush2.msra.mxu0 0.0
    %476 = vmatprep.subr.mxu0 0.0
    %477 = vmatpush2.msra.mxu0 0.0
    %478 = vmatprep.mubr.f32.mxu0 0.0
    %479 = vmatmul.mubr.f32.gmra.mxu0 %v412
    %v480 = vpop.f32.mrf.mxu0
    %v481 = vadd.f32 0.0, %v480
    %v482 = vpop.f32.mrf.mxu0
    %483 = vdwg.mxu0
    %v484 = vadd.f32 %v105, %v481
    %v485 = vtanh.pop %v484
    %v486 = vxor.u32 %v484, 2147483648
    %v487 = vmul.f32 %v486, 1.442695
    %v488 = vpow.pop %v487
    %v489 = vadd.f32 %v488, 1.0
    %v490 = vrcp.pop %v489
    %v491 = vmul.f32 1.0, %v490
    %v492 = vsel %vm308, %v485, %v491
    %v493 = vmul.f32 %v492, %v402
    %495 = vrot.lane.b32.xlu0 %v492, 64
    %v496 = vpop.permute.xlu0 %495
    %v498 = vmul.f32 %v492, %v496
    %500 = vrot.lane.b32.xlu0 %v498, 32
    %v501 = vpop.permute.xlu0 %500
    %v503 = vadd.f32 %v493, %v501
    %v504 = vtanh.pop %v503
    %506 = vrot.lane.b32.xlu0 %v504, 64
    %v507 = vpop.permute.xlu0 %506
    %v509 = vmul.f32 %v492, %v507
    %511 = vrot.lane.b32.xlu0 %v509, 32
    %v512 = vpop.permute.xlu0 %511
    %v513 = vsel %vm309, %v512, 0
    %515 = vmatprep.subr.mxu0 0.0
    %516 = vmatpush1.msra.mxu0 0.0
    %517 = vmatprep.subr.mxu0 0.0
    %518 = vmatpush1.msra.mxu0 0.0
    %519 = vmatprep.subr.mxu0 0.0
    %520 = vmatpush1.msra.mxu0 0.0
    %521 = vmatprep.subr.mxu0 0.0
    %522 = vmatpush1.msra.mxu0 0.0
    %523 = vmatprep.subr.mxu0 0.0
    %524 = vmatpush1.msra.mxu0 0.0
    %525 = vmatprep.subr.mxu0 0.0
    %526 = vmatpush1.msra.mxu0 0.0
    %527 = vmatprep.subr.mxu0 0.0
    %528 = vmatpush1.msra.mxu0 0.0
    %529 = vmatprep.subr.mxu0 0.0
    %530 = vmatpush1.msra.mxu0 0.0
    %531 = vmatprep.subr.mxu0 0.0
    %532 = vmatpush1.msra.mxu0 0.0
    %533 = vmatprep.subr.mxu0 0.0
    %534 = vmatpush1.msra.mxu0 0.0
    %535 = vmatprep.subr.mxu0 0.0
    %536 = vmatpush1.msra.mxu0 0.0
    %537 = vmatprep.subr.mxu0 0.0
    %538 = vmatpush1.msra.mxu0 0.0
    %539 = vmatprep.subr.mxu0 0.0
    %540 = vmatpush1.msra.mxu0 %v36
    %541 = vmatprep.subr.mxu0 0.0
    %542 = vmatpush1.msra.mxu0 %v35
    %543 = vmatprep.subr.mxu0 0.0
    %544 = vmatpush1.msra.mxu0 %v34
    %545 = vmatprep.subr.mxu0 0.0
    %546 = vmatpush1.msra.mxu0 %v33
    %547 = vmatprep.subr.mxu0 0.0
    %548 = vmatpush2.msra.mxu0 0.0
    %549 = vmatprep.subr.mxu0 0.0
    %550 = vmatpush2.msra.mxu0 0.0
    %551 = vmatprep.subr.mxu0 0.0
    %552 = vmatpush2.msra.mxu0 0.0
    %553 = vmatprep.subr.mxu0 0.0
    %554 = vmatpush2.msra.mxu0 0.0
    %555 = vmatprep.subr.mxu0 0.0
    %556 = vmatpush2.msra.mxu0 0.0
    %557 = vmatprep.subr.mxu0 0.0
    %558 = vmatpush2.msra.mxu0 0.0
    %559 = vmatprep.subr.mxu0 0.0
    %560 = vmatpush2.msra.mxu0 0.0
    %561 = vmatprep.subr.mxu0 0.0
    %562 = vmatpush2.msra.mxu0 0.0
    %563 = vmatprep.subr.mxu0 0.0
    %564 = vmatpush2.msra.mxu0 0.0
    %565 = vmatprep.subr.mxu0 0.0
    %566 = vmatpush2.msra.mxu0 0.0
    %567 = vmatprep.subr.mxu0 0.0
    %568 = vmatpush2.msra.mxu0 0.0
    %569 = vmatprep.subr.mxu0 0.0
    %570 = vmatpush2.msra.mxu0 0.0
    %571 = vmatprep.subr.mxu0 0.0
    %572 = vmatpush2.msra.mxu0 0.0
    %573 = vmatprep.subr.mxu0 0.0
    %574 = vmatpush2.msra.mxu0 0.0
    %575 = vmatprep.subr.mxu0 0.0
    %576 = vmatpush2.msra.mxu0 0.0
    %577 = vmatprep.subr.mxu0 0.0
    %578 = vmatpush2.msra.mxu0 0.0
    %579 = vmatprep.mubr.f32.mxu0 0.0
    %580 = vmatmul.mubr.f32.gmra.mxu0 %v513
    %v581 = vpop.f32.mrf.mxu0
    %v582 = vadd.f32 0.0, %v581
    %v583 = vpop.f32.mrf.mxu0
    %584 = vdwg.mxu0
    %v585 = vadd.f32 %v138, %v582
    %v586 = vtanh.pop %v585
    %v587 = vxor.u32 %v585, 2147483648
    %v588 = vmul.f32 %v587, 1.442695
    %v589 = vpow.pop %v588
    %v590 = vadd.f32 %v589, 1.0
    %v591 = vrcp.pop %v590
    %v592 = vmul.f32 1.0, %v591
    %v593 = vsel %vm308, %v586, %v592
    %v594 = vmul.f32 %v593, %v503
    %596 = vrot.lane.b32.xlu0 %v593, 64
    %v597 = vpop.permute.xlu0 %596
    %v599 = vmul.f32 %v593, %v597
    %601 = vrot.lane.b32.xlu0 %v599, 32
    %v602 = vpop.permute.xlu0 %601
    %v604 = vadd.f32 %v594, %v602
    %v605 = vtanh.pop %v604
    %607 = vrot.lane.b32.xlu0 %v605, 64
    %v608 = vpop.permute.xlu0 %607
    %v610 = vmul.f32 %v593, %v608
    %612 = vrot.lane.b32.xlu0 %v610, 32
    %v613 = vpop.permute.xlu0 %612
    %v614 = vsel %vm309, %v613, 0
    %616 = vmatprep.subr.mxu0 0.0
    %617 = vmatpush1.msra.mxu0 0.0
    %618 = vmatprep.subr.mxu0 0.0
    %619 = vmatpush1.msra.mxu0 0.0
    %620 = vmatprep.subr.mxu0 0.0
    %621 = vmatpush1.msra.mxu0 0.0
    %622 = vmatprep.subr.mxu0 0.0
    %623 = vmatpush1.msra.mxu0 0.0
    %624 = vmatprep.subr.mxu0 0.0
    %625 = vmatpush1.msra.mxu0 0.0
    %626 = vmatprep.subr.mxu0 0.0
    %627 = vmatpush1.msra.mxu0 0.0
    %628 = vmatprep.subr.mxu0 0.0
    %629 = vmatpush1.msra.mxu0 0.0
    %630 = vmatprep.subr.mxu0 0.0
    %631 = vmatpush1.msra.mxu0 0.0
    %632 = vmatprep.subr.mxu0 0.0
    %633 = vmatpush1.msra.mxu0 0.0
    %634 = vmatprep.subr.mxu0 0.0
    %635 = vmatpush1.msra.mxu0 0.0
    %636 = vmatprep.subr.mxu0 0.0
    %637 = vmatpush1.msra.mxu0 0.0
    %638 = vmatprep.subr.mxu0 0.0
    %639 = vmatpush1.msra.mxu0 0.0
    %640 = vmatprep.subr.mxu0 0.0
    %641 = vmatpush1.msra.mxu0 %v36
    %642 = vmatprep.subr.mxu0 0.0
    %643 = vmatpush1.msra.mxu0 %v35
    %644 = vmatprep.subr.mxu0 0.0
    %645 = vmatpush1.msra.mxu0 %v34
    %646 = vmatprep.subr.mxu0 0.0
    %647 = vmatpush1.msra.mxu0 %v33
    %648 = vmatprep.subr.mxu0 0.0
    %649 = vmatpush2.msra.mxu0 0.0
    %650 = vmatprep.subr.mxu0 0.0
    %651 = vmatpush2.msra.mxu0 0.0
    %652 = vmatprep.subr.mxu0 0.0
    %653 = vmatpush2.msra.mxu0 0.0
    %654 = vmatprep.subr.mxu0 0.0
    %655 = vmatpush2.msra.mxu0 0.0
    %656 = vmatprep.subr.mxu0 0.0
    %657 = vmatpush2.msra.mxu0 0.0
    %658 = vmatprep.subr.mxu0 0.0
    %659 = vmatpush2.msra.mxu0 0.0
    %660 = vmatprep.subr.mxu0 0.0
    %661 = vmatpush2.msra.mxu0 0.0
    %662 = vmatprep.subr.mxu0 0.0
    %663 = vmatpush2.msra.mxu0 0.0
    %664 = vmatprep.subr.mxu0 0.0
    %665 = vmatpush2.msra.mxu0 0.0
    %666 = vmatprep.subr.mxu0 0.0
    %667 = vmatpush2.msra.mxu0 0.0
    %668 = vmatprep.subr.mxu0 0.0
    %669 = vmatpush2.msra.mxu0 0.0
    %670 = vmatprep.subr.mxu0 0.0
    %671 = vmatpush2.msra.mxu0 0.0
    %672 = vmatprep.subr.mxu0 0.0
    %673 = vmatpush2.msra.mxu0 0.0
    %674 = vmatprep.subr.mxu0 0.0
    %675 = vmatpush2.msra.mxu0 0.0
    %676 = vmatprep.subr.mxu0 0.0
    %677 = vmatpush2.msra.mxu0 0.0
    %678 = vmatprep.subr.mxu0 0.0
    %679 = vmatpush2.msra.mxu0 0.0
    %680 = vmatprep.mubr.f32.mxu0 0.0
    %681 = vmatmul.mubr.f32.gmra.mxu0 %v614
    %v682 = vpop.f32.mrf.mxu0
    %v683 = vadd.f32 0.0, %v682
    %v684 = vpop.f32.mrf.mxu0
    %685 = vdwg.mxu0
    %v686 = vadd.f32 %v171, %v683
    %v687 = vtanh.pop %v686
    %v688 = vxor.u32 %v686, 2147483648
    %v689 = vmul.f32 %v688, 1.442695
    %v690 = vpow.pop %v689
    %v691 = vadd.f32 %v690, 1.0
    %v692 = vrcp.pop %v691
    %v693 = vmul.f32 1.0, %v692
    %v694 = vsel %vm308, %v687, %v693
    %v695 = vmul.f32 %v694, %v604
    %697 = vrot.lane.b32.xlu0 %v694, 64
    %v698 = vpop.permute.xlu0 %697
    %v700 = vmul.f32 %v694, %v698
    %702 = vrot.lane.b32.xlu0 %v700, 32
    %v703 = vpop.permute.xlu0 %702
    %v705 = vadd.f32 %v695, %v703
    %v706 = vtanh.pop %v705
    %708 = vrot.lane.b32.xlu0 %v706, 64
    %v709 = vpop.permute.xlu0 %708
    %v711 = vmul.f32 %v694, %v709
    %713 = vrot.lane.b32.xlu0 %v711, 32
    %v714 = vpop.permute.xlu0 %713
    %v715 = vsel %vm309, %v714, 0
    %717 = vmatprep.subr.mxu0 0.0
    %718 = vmatpush1.msra.mxu0 0.0
    %719 = vmatprep.subr.mxu0 0.0
    %720 = vmatpush1.msra.mxu0 0.0
    %721 = vmatprep.subr.mxu0 0.0
    %722 = vmatpush1.msra.mxu0 0.0
    %723 = vmatprep.subr.mxu0 0.0
    %724 = vmatpush1.msra.mxu0 0.0
    %725 = vmatprep.subr.mxu0 0.0
    %726 = vmatpush1.msra.mxu0 0.0
    %727 = vmatprep.subr.mxu0 0.0
    %728 = vmatpush1.msra.mxu0 0.0
    %729 = vmatprep.subr.mxu0 0.0
    %730 = vmatpush1.msra.mxu0 0.0
    %731 = vmatprep.subr.mxu0 0.0
    %732 = vmatpush1.msra.mxu0 0.0
    %733 = vmatprep.subr.mxu0 0.0
    %734 = vmatpush1.msra.mxu0 0.0
    %735 = vmatprep.subr.mxu0 0.0
    %736 = vmatpush1.msra.mxu0 0.0
    %737 = vmatprep.subr.mxu0 0.0
    %738 = vmatpush1.msra.mxu0 0.0
    %739 = vmatprep.subr.mxu0 0.0
    %740 = vmatpush1.msra.mxu0 0.0
    %741 = vmatprep.subr.mxu0 0.0
    %742 = vmatpush1.msra.mxu0 %v36
    %743 = vmatprep.subr.mxu0 0.0
    %744 = vmatpush1.msra.mxu0 %v35
    %745 = vmatprep.subr.mxu0 0.0
    %746 = vmatpush1.msra.mxu0 %v34
    %747 = vmatprep.subr.mxu0 0.0
    %748 = vmatpush1.msra.mxu0 %v33
    %749 = vmatprep.subr.mxu0 0.0
    %750 = vmatpush2.msra.mxu0 0.0
    %751 = vmatprep.subr.mxu0 0.0
    %752 = vmatpush2.msra.mxu0 0.0
    %753 = vmatprep.subr.mxu0 0.0
    %754 = vmatpush2.msra.mxu0 0.0
    %755 = vmatprep.subr.mxu0 0.0
    %756 = vmatpush2.msra.mxu0 0.0
    %757 = vmatprep.subr.mxu0 0.0
    %758 = vmatpush2.msra.mxu0 0.0
    %759 = vmatprep.subr.mxu0 0.0
    %760 = vmatpush2.msra.mxu0 0.0
    %761 = vmatprep.subr.mxu0 0.0
    %762 = vmatpush2.msra.mxu0 0.0
    %763 = vmatprep.subr.mxu0 0.0
    %764 = vmatpush2.msra.mxu0 0.0
    %765 = vmatprep.subr.mxu0 0.0
    %766 = vmatpush2.msra.mxu0 0.0
    %767 = vmatprep.subr.mxu0 0.0
    %768 = vmatpush2.msra.mxu0 0.0
    %769 = vmatprep.subr.mxu0 0.0
    %770 = vmatpush2.msra.mxu0 0.0
    %771 = vmatprep.subr.mxu0 0.0
    %772 = vmatpush2.msra.mxu0 0.0
    %773 = vmatprep.subr.mxu0 0.0
    %774 = vmatpush2.msra.mxu0 0.0
    %775 = vmatprep.subr.mxu0 0.0
    %776 = vmatpush2.msra.mxu0 0.0
    %777 = vmatprep.subr.mxu0 0.0
    %778 = vmatpush2.msra.mxu0 0.0
    %779 = vmatprep.subr.mxu0 0.0
    %780 = vmatpush2.msra.mxu0 0.0
    %781 = vmatprep.mubr.f32.mxu0 0.0
    %782 = vmatmul.mubr.f32.gmra.mxu0 %v715
    %v783 = vpop.f32.mrf.mxu0
    %v784 = vadd.f32 0.0, %v783
    %v785 = vpop.f32.mrf.mxu0
    %786 = vdwg.mxu0
    %v787 = vadd.f32 %v204, %v784
    %v788 = vtanh.pop %v787
    %v789 = vxor.u32 %v787, 2147483648
    %v790 = vmul.f32 %v789, 1.442695
    %v791 = vpow.pop %v790
    %v792 = vadd.f32 %v791, 1.0
    %v793 = vrcp.pop %v792
    %v794 = vmul.f32 1.0, %v793
    %v795 = vsel %vm308, %v788, %v794
    %v796 = vmul.f32 %v795, %v705
    %798 = vrot.lane.b32.xlu0 %v795, 64
    %v799 = vpop.permute.xlu0 %798
    %v801 = vmul.f32 %v795, %v799
    %803 = vrot.lane.b32.xlu0 %v801, 32
    %v804 = vpop.permute.xlu0 %803
    %v806 = vadd.f32 %v796, %v804
    %v807 = vtanh.pop %v806
    %809 = vrot.lane.b32.xlu0 %v807, 64
    %v810 = vpop.permute.xlu0 %809
    %v812 = vmul.f32 %v795, %v810
    %814 = vrot.lane.b32.xlu0 %v812, 32
    %v815 = vpop.permute.xlu0 %814
    %v816 = vsel %vm309, %v815, 0
    %818 = vmatprep.subr.mxu0 0.0
    %819 = vmatpush1.msra.mxu0 0.0
    %820 = vmatprep.subr.mxu0 0.0
    %821 = vmatpush1.msra.mxu0 0.0
    %822 = vmatprep.subr.mxu0 0.0
    %823 = vmatpush1.msra.mxu0 0.0
    %824 = vmatprep.subr.mxu0 0.0
    %825 = vmatpush1.msra.mxu0 0.0
    %826 = vmatprep.subr.mxu0 0.0
    %827 = vmatpush1.msra.mxu0 0.0
    %828 = vmatprep.subr.mxu0 0.0
    %829 = vmatpush1.msra.mxu0 0.0
    %830 = vmatprep.subr.mxu0 0.0
    %831 = vmatpush1.msra.mxu0 0.0
    %832 = vmatprep.subr.mxu0 0.0
    %833 = vmatpush1.msra.mxu0 0.0
    %834 = vmatprep.subr.mxu0 0.0
    %835 = vmatpush1.msra.mxu0 0.0
    %836 = vmatprep.subr.mxu0 0.0
    %837 = vmatpush1.msra.mxu0 0.0
    %838 = vmatprep.subr.mxu0 0.0
    %839 = vmatpush1.msra.mxu0 0.0
    %840 = vmatprep.subr.mxu0 0.0
    %841 = vmatpush1.msra.mxu0 0.0
    %842 = vmatprep.subr.mxu0 0.0
    %843 = vmatpush1.msra.mxu0 %v36
    %844 = vmatprep.subr.mxu0 0.0
    %845 = vmatpush1.msra.mxu0 %v35
    %846 = vmatprep.subr.mxu0 0.0
    %847 = vmatpush1.msra.mxu0 %v34
    %848 = vmatprep.subr.mxu0 0.0
    %849 = vmatpush1.msra.mxu0 %v33
    %850 = vmatprep.subr.mxu0 0.0
    %851 = vmatpush2.msra.mxu0 0.0
    %852 = vmatprep.subr.mxu0 0.0
    %853 = vmatpush2.msra.mxu0 0.0
    %854 = vmatprep.subr.mxu0 0.0
    %855 = vmatpush2.msra.mxu0 0.0
    %856 = vmatprep.subr.mxu0 0.0
    %857 = vmatpush2.msra.mxu0 0.0
    %858 = vmatprep.subr.mxu0 0.0
    %859 = vmatpush2.msra.mxu0 0.0
    %860 = vmatprep.subr.mxu0 0.0
    %861 = vmatpush2.msra.mxu0 0.0
    %862 = vmatprep.subr.mxu0 0.0
    %863 = vmatpush2.msra.mxu0 0.0
    %864 = vmatprep.subr.mxu0 0.0
    %865 = vmatpush2.msra.mxu0 0.0
    %866 = vmatprep.subr.mxu0 0.0
    %867 = vmatpush2.msra.mxu0 0.0
    %868 = vmatprep.subr.mxu0 0.0
    %869 = vmatpush2.msra.mxu0 0.0
    %870 = vmatprep.subr.mxu0 0.0
    %871 = vmatpush2.msra.mxu0 0.0
    %872 = vmatprep.subr.mxu0 0.0
    %873 = vmatpush2.msra.mxu0 0.0
    %874 = vmatprep.subr.mxu0 0.0
    %875 = vmatpush2.msra.mxu0 0.0
    %876 = vmatprep.subr.mxu0 0.0
    %877 = vmatpush2.msra.mxu0 0.0
    %878 = vmatprep.subr.mxu0 0.0
    %879 = vmatpush2.msra.mxu0 0.0
    %880 = vmatprep.subr.mxu0 0.0
    %881 = vmatpush2.msra.mxu0 0.0
    %882 = vmatprep.mubr.f32.mxu0 0.0
    %883 = vmatmul.mubr.f32.gmra.mxu0 %v816
    %v884 = vpop.f32.mrf.mxu0
    %v885 = vadd.f32 0.0, %v884
    %v886 = vpop.f32.mrf.mxu0
    %887 = vdwg.mxu0
    %v888 = vadd.f32 %v237, %v885
    %v889 = vtanh.pop %v888
    %v890 = vxor.u32 %v888, 2147483648
    %v891 = vmul.f32 %v890, 1.442695
    %v892 = vpow.pop %v891
    %v893 = vadd.f32 %v892, 1.0
    %v894 = vrcp.pop %v893
    %v895 = vmul.f32 1.0, %v894
    %v896 = vsel %vm308, %v889, %v895
    %v897 = vmul.f32 %v896, %v806
    %899 = vrot.lane.b32.xlu0 %v896, 64
    %v900 = vpop.permute.xlu0 %899
    %v902 = vmul.f32 %v896, %v900
    %904 = vrot.lane.b32.xlu0 %v902, 32
    %v905 = vpop.permute.xlu0 %904
    %v907 = vadd.f32 %v897, %v905
    %v908 = vtanh.pop %v907
    %910 = vrot.lane.b32.xlu0 %v908, 64
    %v911 = vpop.permute.xlu0 %910
    %v913 = vmul.f32 %v896, %v911
    %915 = vrot.lane.b32.xlu0 %v913, 32
    %v916 = vpop.permute.xlu0 %915
    %v917 = vsel %vm309, %v916, 0
    %919 = vmatprep.subr.mxu0 0.0
    %920 = vmatpush1.msra.mxu0 0.0
    %921 = vmatprep.subr.mxu0 0.0
    %922 = vmatpush1.msra.mxu0 0.0
    %923 = vmatprep.subr.mxu0 0.0
    %924 = vmatpush1.msra.mxu0 0.0
    %925 = vmatprep.subr.mxu0 0.0
    %926 = vmatpush1.msra.mxu0 0.0
    %927 = vmatprep.subr.mxu0 0.0
    %928 = vmatpush1.msra.mxu0 0.0
    %929 = vmatprep.subr.mxu0 0.0
    %930 = vmatpush1.msra.mxu0 0.0
    %931 = vmatprep.subr.mxu0 0.0
    %932 = vmatpush1.msra.mxu0 0.0
    %933 = vmatprep.subr.mxu0 0.0
    %934 = vmatpush1.msra.mxu0 0.0
    %935 = vmatprep.subr.mxu0 0.0
    %936 = vmatpush1.msra.mxu0 0.0
    %937 = vmatprep.subr.mxu0 0.0
    %938 = vmatpush1.msra.mxu0 0.0
    %939 = vmatprep.subr.mxu0 0.0
    %940 = vmatpush1.msra.mxu0 0.0
    %941 = vmatprep.subr.mxu0 0.0
    %942 = vmatpush1.msra.mxu0 0.0
    %943 = vmatprep.subr.mxu0 0.0
    %944 = vmatpush1.msra.mxu0 %v36
    %945 = vmatprep.subr.mxu0 0.0
    %946 = vmatpush1.msra.mxu0 %v35
    %947 = vmatprep.subr.mxu0 0.0
    %948 = vmatpush1.msra.mxu0 %v34
    %949 = vmatprep.subr.mxu0 0.0
    %950 = vmatpush1.msra.mxu0 %v33
    %951 = vmatprep.subr.mxu0 0.0
    %952 = vmatpush2.msra.mxu0 0.0
    %953 = vmatprep.subr.mxu0 0.0
    %954 = vmatpush2.msra.mxu0 0.0
    %955 = vmatprep.subr.mxu0 0.0
    %956 = vmatpush2.msra.mxu0 0.0
    %957 = vmatprep.subr.mxu0 0.0
    %958 = vmatpush2.msra.mxu0 0.0
    %959 = vmatprep.subr.mxu0 0.0
    %960 = vmatpush2.msra.mxu0 0.0
    %961 = vmatprep.subr.mxu0 0.0
    %962 = vmatpush2.msra.mxu0 0.0
    %963 = vmatprep.subr.mxu0 0.0
    %964 = vmatpush2.msra.mxu0 0.0
    %965 = vmatprep.subr.mxu0 0.0
    %966 = vmatpush2.msra.mxu0 0.0
    %967 = vmatprep.subr.mxu0 0.0
    %968 = vmatpush2.msra.mxu0 0.0
    %969 = vmatprep.subr.mxu0 0.0
    %970 = vmatpush2.msra.mxu0 0.0
    %971 = vmatprep.subr.mxu0 0.0
    %972 = vmatpush2.msra.mxu0 0.0
    %973 = vmatprep.subr.mxu0 0.0
    %974 = vmatpush2.msra.mxu0 0.0
    %975 = vmatprep.subr.mxu0 0.0
    %976 = vmatpush2.msra.mxu0 0.0
    %977 = vmatprep.subr.mxu0 0.0
    %978 = vmatpush2.msra.mxu0 0.0
    %979 = vmatprep.subr.mxu0 0.0
    %980 = vmatpush2.msra.mxu0 0.0
    %981 = vmatprep.subr.mxu0 0.0
    %982 = vmatpush2.msra.mxu0 0.0
    %983 = vmatprep.mubr.f32.mxu0 0.0
    %984 = vmatmul.mubr.f32.gmra.mxu0 %v917
    %v985 = vpop.f32.mrf.mxu0
    %v986 = vadd.f32 0.0, %v985
    %v987 = vpop.f32.mrf.mxu0
    %988 = vdwg.mxu0
    %v989 = vadd.f32 %v270, %v986
    %v990 = vtanh.pop %v989
    %v991 = vxor.u32 %v989, 2147483648
    %v992 = vmul.f32 %v991, 1.442695
    %v993 = vpow.pop %v992
    %v994 = vadd.f32 %v993, 1.0
    %v995 = vrcp.pop %v994
    %v996 = vmul.f32 1.0, %v995
    %v997 = vsel %vm308, %v990, %v996
    %v998 = vmul.f32 %v997, %v907
    %1000 = vrot.lane.b32.xlu0 %v997, 64
    %v1001 = vpop.permute.xlu0 %1000
    %v1003 = vmul.f32 %v997, %v1001
    %1005 = vrot.lane.b32.xlu0 %v1003, 32
    %v1006 = vpop.permute.xlu0 %1005
    %v1008 = vadd.f32 %v998, %v1006
    %v1009 = vtanh.pop %v1008
    %1011 = vrot.lane.b32.xlu0 %v1009, 64
    %v1012 = vpop.permute.xlu0 %1011
    %v1014 = vmul.f32 %v997, %v1012
    %1016 = vrot.lane.b32.xlu0 %v1014, 32
    %v1017 = vpop.permute.xlu0 %1016
    %v1018 = vsel %vm309, %v1017, 0
    %1020 = vmatprep.subr.mxu0 0.0
    %1021 = vmatpush1.msra.mxu0 0.0
    %1022 = vmatprep.subr.mxu0 0.0
    %1023 = vmatpush1.msra.mxu0 0.0
    %1024 = vmatprep.subr.mxu0 0.0
    %1025 = vmatpush1.msra.mxu0 0.0
    %1026 = vmatprep.subr.mxu0 0.0
    %1027 = vmatpush1.msra.mxu0 0.0
    %1028 = vmatprep.subr.mxu0 0.0
    %1029 = vmatpush1.msra.mxu0 0.0
    %1030 = vmatprep.subr.mxu0 0.0
    %1031 = vmatpush1.msra.mxu0 0.0
    %1032 = vmatprep.subr.mxu0 0.0
    %1033 = vmatpush1.msra.mxu0 0.0
    %1034 = vmatprep.subr.mxu0 0.0
    %1035 = vmatpush1.msra.mxu0 0.0
    %1036 = vmatprep.subr.mxu0 0.0
    %1037 = vmatpush1.msra.mxu0 0.0
    %1038 = vmatprep.subr.mxu0 0.0
    %1039 = vmatpush1.msra.mxu0 0.0
    %1040 = vmatprep.subr.mxu0 0.0
    %1041 = vmatpush1.msra.mxu0 0.0
    %1042 = vmatprep.subr.mxu0 0.0
    %1043 = vmatpush1.msra.mxu0 0.0
    %1044 = vmatprep.subr.mxu0 0.0
    %1045 = vmatpush1.msra.mxu0 %v36
    %1046 = vmatprep.subr.mxu0 0.0
    %1047 = vmatpush1.msra.mxu0 %v35
    %1048 = vmatprep.subr.mxu0 0.0
    %1049 = vmatpush1.msra.mxu0 %v34
    %1050 = vmatprep.subr.mxu0 0.0
    %1051 = vmatpush1.msra.mxu0 %v33
    %1052 = vmatprep.subr.mxu0 0.0
    %1053 = vmatpush2.msra.mxu0 0.0
    %1054 = vmatprep.subr.mxu0 0.0
    %1055 = vmatpush2.msra.mxu0 0.0
    %1056 = vmatprep.subr.mxu0 0.0
    %1057 = vmatpush2.msra.mxu0 0.0
    %1058 = vmatprep.subr.mxu0 0.0
    %1059 = vmatpush2.msra.mxu0 0.0
    %1060 = vmatprep.subr.mxu0 0.0
    %1061 = vmatpush2.msra.mxu0 0.0
    %1062 = vmatprep.subr.mxu0 0.0
    %1063 = vmatpush2.msra.mxu0 0.0
    %1064 = vmatprep.subr.mxu0 0.0
    %1065 = vmatpush2.msra.mxu0 0.0
    %1066 = vmatprep.subr.mxu0 0.0
    %1067 = vmatpush2.msra.mxu0 0.0
    %1068 = vmatprep.subr.mxu0 0.0
    %1069 = vmatpush2.msra.mxu0 0.0
    %1070 = vmatprep.subr.mxu0 0.0
    %1071 = vmatpush2.msra.mxu0 0.0
    %1072 = vmatprep.subr.mxu0 0.0
    %1073 = vmatpush2.msra.mxu0 0.0
    %1074 = vmatprep.subr.mxu0 0.0
    %1075 = vmatpush2.msra.mxu0 0.0
    %1076 = vmatprep.subr.mxu0 0.0
    %1077 = vmatpush2.msra.mxu0 0.0
    %1078 = vmatprep.subr.mxu0 0.0
    %1079 = vmatpush2.msra.mxu0 0.0
    %1080 = vmatprep.subr.mxu0 0.0
    %1081 = vmatpush2.msra.mxu0 0.0
    %1082 = vmatprep.subr.mxu0 0.0
    %1083 = vmatpush2.msra.mxu0 0.0
    %1084 = vmatprep.mubr.f32.mxu0 0.0
    %1085 = vmatmul.mubr.f32.gmra.mxu0 %v1018
    %v1086 = vpop.f32.mrf.mxu0
    %v1087 = vadd.f32 0.0, %v1086
    %v1088 = vpop.f32.mrf.mxu0
    %1089 = vdwg.mxu0
    %v1090 = vadd.f32 %v303, %v1087
    %v1091 = vtanh.pop %v1090
    %v1092 = vxor.u32 %v1090, 2147483648
    %v1093 = vmul.f32 %v1092, 1.442695
    %v1094 = vpow.pop %v1093
    %v1095 = vadd.f32 %v1094, 1.0
    %v1096 = vrcp.pop %v1095
    %v1097 = vmul.f32 1.0, %v1096
    %v1098 = vsel %vm308, %v1091, %v1097
    %v1099 = vmul.f32 %v1098, %v1008
    %1101 = vrot.lane.b32.xlu0 %v1098, 64
    %v1102 = vpop.permute.xlu0 %1101
    %v1104 = vmul.f32 %v1098, %v1102
    %1106 = vrot.lane.b32.xlu0 %v1104, 32
    %v1107 = vpop.permute.xlu0 %1106
    %v1109 = vadd.f32 %v1099, %v1107
    %v1110 = vtanh.pop %v1109
    %1112 = vrot.lane.b32.xlu0 %v1110, 64
    %v1113 = vpop.permute.xlu0 %1112
    %v1115 = vmul.f32 %v1098, %v1113
    %v1116 = vld [vmem:[%s3] sm:$0xff]
    %v1117 = vld [vmem:[%s3 + $0x8] sm:$0xff]
    %v1118 = vld [vmem:[%s3 + $0x10] sm:$0xff]
    %v1119 = vld [vmem:[%s3 + $0x18] sm:$0xff]
    %v1120 = vld [vmem:[%s4] sm:$0x1]
    %v1122 = vlaneseq
    %v1123 = vshrl.u32 %v1122, 7
    %v1124 = vsub.s32 0, %v1123
    %v1125 = vrot.slane %v1120, %v1124
    %1128 = vrot.lane.b32.xlu0 %v1115, 32
    %v1129 = vpop.permute.xlu0 %1128
    %v1130 = vsel %vm309, %v1129, 0
    %1132 = vmatprep.subr.mxu0 0.0
    %1133 = vmatpush1.msra.mxu0 0.0
    %1134 = vmatprep.subr.mxu0 0.0
    %1135 = vmatpush1.msra.mxu0 0.0
    %1136 = vmatprep.subr.mxu0 0.0
    %1137 = vmatpush1.msra.mxu0 0.0
    %1138 = vmatprep.subr.mxu0 0.0
    %1139 = vmatpush1.msra.mxu0 0.0
    %1140 = vmatprep.subr.mxu0 0.0
    %1141 = vmatpush1.msra.mxu0 0.0
    %1142 = vmatprep.subr.mxu0 0.0
    %1143 = vmatpush1.msra.mxu0 0.0
    %1144 = vmatprep.subr.mxu0 0.0
    %1145 = vmatpush1.msra.mxu0 0.0
    %1146 = vmatprep.subr.mxu0 0.0
    %1147 = vmatpush1.msra.mxu0 0.0
    %1148 = vmatprep.subr.mxu0 0.0
    %1149 = vmatpush1.msra.mxu0 0.0
    %1150 = vmatprep.subr.mxu0 0.0
    %1151 = vmatpush1.msra.mxu0 0.0
    %1152 = vmatprep.subr.mxu0 0.0
    %1153 = vmatpush1.msra.mxu0 0.0
    %1154 = vmatprep.subr.mxu0 0.0
    %1155 = vmatpush1.msra.mxu0 0.0
    %1156 = vmatprep.subr.mxu0 0.0
    %1157 = vmatpush1.msra.mxu0 %v1119
    %1158 = vmatprep.subr.mxu0 0.0
    %1159 = vmatpush1.msra.mxu0 %v1118
    %1160 = vmatprep.subr.mxu0 0.0
    %1161 = vmatpush1.msra.mxu0 %v1117
    %1162 = vmatprep.subr.mxu0 0.0
    %1163 = vmatpush1.msra.mxu0 %v1116
    %1164 = vmatprep.subr.mxu0 0.0
    %1165 = vmatpush2.msra.mxu0 0.0
    %1166 = vmatprep.subr.mxu0 0.0
    %1167 = vmatpush2.msra.mxu0 0.0
    %1168 = vmatprep.subr.mxu0 0.0
    %1169 = vmatpush2.msra.mxu0 0.0
    %1170 = vmatprep.subr.mxu0 0.0
    %1171 = vmatpush2.msra.mxu0 0.0
    %1172 = vmatprep.subr.mxu0 0.0
    %1173 = vmatpush2.msra.mxu0 0.0
    %1174 = vmatprep.subr.mxu0 0.0
    %1175 = vmatpush2.msra.mxu0 0.0
    %1176 = vmatprep.subr.mxu0 0.0
    %1177 = vmatpush2.msra.mxu0 0.0
    %1178 = vmatprep.subr.mxu0 0.0
    %1179 = vmatpush2.msra.mxu0 0.0
    %1180 = vmatprep.subr.mxu0 0.0
    %1181 = vmatpush2.msra.mxu0 0.0
    %1182 = vmatprep.subr.mxu0 0.0
    %1183 = vmatpush2.msra.mxu0 0.0
    %1184 = vmatprep.subr.mxu0 0.0
    %1185 = vmatpush2.msra.mxu0 0.0
    %1186 = vmatprep.subr.mxu0 0.0
    %1187 = vmatpush2.msra.mxu0 0.0
    %1188 = vmatprep.subr.mxu0 0.0
    %1189 = vmatpush2.msra.mxu0 0.0
    %1190 = vmatprep.subr.mxu0 0.0
    %1191 = vmatpush2.msra.mxu0 0.0
    %1192 = vmatprep.subr.mxu0 0.0
    %1193 = vmatpush2.msra.mxu0 0.0
    %1194 = vmatprep.subr.mxu0 0.0
    %1195 = vmatpush2.msra.mxu0 0.0
    %1196 = vmatprep.mubr.f32.mxu0 0.0
    %1197 = vmatmul.mubr.f32.gmra.mxu0 %v1130
    %v1198 = vpop.f32.mrf.mxu0
    %v1199 = vadd.f32 %v1125, %v1198
    %v1200 = vpop.f32.mrf.mxu0
    %1201 = vdwg.mxu0
    %vm1202 = vcmask 93184
    %1203 = vst.msk [vmem:[%s5] sm:$0xf] %vm1202, %v1199
    // Predicated region
    $region26: #{lstm_1_in_2_out.1} parent=1 // pred_check
      _
    $region27: #{lstm_1_in_2_out.1} parent=1 // pred_check_branch
      %1205 = sbr.rel (0) target = $region29
    $region28: #{lstm_1_in_2_out.1} parent=1 // pred_region
      _
    $region29: #{lstm_1_in_2_out.1} parent=1 // pred_fallthru
      _
    // Predicated region
    $region30: #{lstm_1_in_2_out.1} parent=1 // pred_check
      _
    $region31: #{lstm_1_in_2_out.1} parent=1 // pred_check_branch
      %1207 = sbr.rel (0) target = $region33
    $region32: #{lstm_1_in_2_out.1} parent=1 // pred_region
      _
    $region33: #{lstm_1_in_2_out.1} parent=1 // pred_fallthru
      _
    %1208 = vsyncpa [#allocation3], 1

</llo_original>
